<compile_context>
chip_gen: v5e
topology: v5e:2x2
jax: 0.10.0
libtpu: 0.0.40
codegen_flags: <defaults>
</compile_context>

<pallas_src>
import functools

import jax
import jax.numpy as jnp
from jax.experimental import pallas as pl
from jax.experimental.pallas import tpu as pltpu


def _pick_block(n, cap):
    """Largest divisor of n that is <= cap, preferring >= 2 grid steps (v7x)."""
    divisors = [d for d in range(1, n + 1) if n % d == 0 and d <= cap]
    multi = [d for d in divisors if n // d >= 2]
    return max(multi) if multi else max(divisors)


# ----------------------------------------------------------------------------
# Kernel 1: fused per-view encoder (conv3x3 + ReLU + global avg pool + FC+ReLU)
# ----------------------------------------------------------------------------

def _encoder_kernel(patch_ref, wconv_ref, bconv_ref, wfc_ref, bfc_ref, out_ref,
                    *, Vb, HW):
    f32 = jnp.float32
    bf16 = jnp.bfloat16

    # Single K=9*C, lane-dense MXU matmul: (C_enc, 9C) @ (9C, Vb*HW).
    conv = jnp.dot(wconv_ref[...], patch_ref[...],
                   preferred_element_type=f32)              # (C_enc, Vb*HW) f32
    conv = jnp.maximum(conv + bconv_ref[...], 0.0)          # bias (C_enc,1) bcast

    C_enc = conv.shape[0]
    # Global average pool per view: dense lane reduce over each view's HW chunk.
    pooled = jnp.sum(conv.reshape(C_enc, Vb, HW), axis=-1) * (1.0 / HW)  # (C_enc,Vb)

    # FC + ReLU, contracting C_enc: (C_enc,Vb) x (C_enc,D_enc) -> (Vb,D_enc).
    enc = jnp.einsum('cv,cd->vd', pooled.astype(bf16), wfc_ref[...],
                     preferred_element_type=f32)
    out_ref[...] = jnp.maximum(enc + bfc_ref[...], 0.0).astype(out_ref.dtype)


def encoder_forward(patches, w_conv2d, b_conv, w_fc, b_fc, *, Vb, HW):
    """patches: (G, 9*C, Vb*HW) bf16 -> (G*Vb, D_enc) f32."""
    G, K, _ = patches.shape
    C_enc = w_conv2d.shape[0]
    D_enc = w_fc.shape[1]

    out = pl.pallas_call(
        functools.partial(_encoder_kernel, Vb=Vb, HW=HW),
        out_shape=jax.ShapeDtypeStruct((G, Vb, D_enc), jnp.float32),
        grid=(G,),
        in_specs=[
            pl.BlockSpec((None, K, Vb * HW), lambda g: (g, 0, 0)),
            pl.BlockSpec((C_enc, K), lambda g: (0, 0)),
            pl.BlockSpec((C_enc, 1), lambda g: (0, 0)),
            pl.BlockSpec((C_enc, D_enc), lambda g: (0, 0)),
            pl.BlockSpec((1, D_enc), lambda g: (0, 0)),
        ],
        out_specs=pl.BlockSpec((None, Vb, D_enc), lambda g: (g, 0, 0)),
        compiler_params=pltpu.CompilerParams(
            dimension_semantics=("parallel",),
            vmem_limit_bytes=32 * 1024 * 1024),
    )(patches, w_conv2d, b_conv, w_fc, b_fc)
    return out.reshape(G * Vb, D_enc)


# ----------------------------------------------------------------------------
# Kernel 2: fused transformer block + view max-pool + hazard head
# ----------------------------------------------------------------------------

def _transformer_head_kernel(enc_ref, valid_ref, emb_ref, mtok_ref,
                             wproj_ref, bproj_ref, wqkv_ref, wo_ref,
                             w1_ref, b1_ref, w2_ref, b2_ref,
                             whead_ref, bhead_ref,
                             logit_ref, hidden_ref):
    f32 = jnp.float32
    bf16 = jnp.bfloat16

    def mm(a, w_ref):  # activations cast to bf16; weights already bf16; f32 acc
        return jnp.dot(a.astype(bf16), w_ref[...], preferred_element_type=f32)

    enc = enc_ref[...]                                   # (Bb, S, D_enc)
    valid = valid_ref[...]                               # (Bb, S, 1) in {0,1}
    Bb, S, D_enc = enc.shape
    D_tr = wproj_ref.shape[1]

    # mask_input: replace padded views with the learned mask token.
    mx = valid * enc + (1.0 - valid) * mtok_ref[...][None]   # (Bb, S, D_enc)

    # projection + time/view/side embeddings (flattened (Bb*S, D) matmuls).
    h = (mm(mx.reshape(Bb * S, D_enc), wproj_ref) + bproj_ref[...]
         + emb_ref[...].reshape(Bb * S, D_tr))               # (Bb*S, D_tr)

    # Fused QKV (1/sqrt(D) pre-folded into the q slice of wqkv).
    qkv = mm(h, wqkv_ref)                                    # (Bb*S, 3*D_tr)
    q = qkv[:, :D_tr].reshape(Bb, S, D_tr)
    k = qkv[:, D_tr:2 * D_tr].reshape(Bb, S, D_tr)
    v = qkv[:, 2 * D_tr:].reshape(Bb, S, D_tr)

    scores = jnp.einsum('bsd,btd->bst', q.astype(bf16), k.astype(bf16),
                        preferred_element_type=f32)          # (Bb, S, S)
    scores = scores - jnp.max(scores, axis=-1, keepdims=True)
    p = jnp.exp(scores)
    p = p * pl.reciprocal(jnp.sum(p, axis=-1, keepdims=True), approx=True)
    attn = jnp.einsum('bst,btd->bsd', p.astype(bf16), v.astype(bf16),
                      preferred_element_type=f32)            # (Bb, S, D_tr)
    h2 = h + mm(attn.reshape(Bb * S, D_tr), wo_ref)

    # MLP block.
    mlp = jnp.maximum(mm(h2, w1_ref) + b1_ref[...], 0.0)
    out = h2 + mm(mlp, w2_ref) + b2_ref[...]                 # (Bb*S, D_tr)

    # [:, :512] channel slice is a no-op for D_tr <= 512.
    # Max-pool over views + ReLU (dropout = identity in eval mode).
    # TODO(synk): risk-factor-conditioned pooling of the original model is
    # replaced with plain global max pooling (risk_factors=None path).
    hidden = jnp.maximum(jnp.max(out.reshape(Bb, S, D_tr), axis=1), 0.0)  # (Bb,D_tr)
    logit = mm(hidden, whead_ref) + bhead_ref[...]                        # (Bb,n_out)

    hidden_ref[...] = hidden.astype(hidden_ref.dtype)
    logit_ref[...] = logit.astype(logit_ref.dtype)


def transformer_head_forward(enc_hidden, valid, emb, p, *, Bb):
    """enc_hidden (B,S,D_enc), valid (B,S,1), emb (B,S,D_tr) -> (logit, hidden)."""
    B, S, D_enc = enc_hidden.shape
    D_tr = p['w_proj'].shape[1]
    Dm = p['w1'].shape[1]
    n_out = p['w_head'].shape[1]
    G = B // Bb
    bf16 = jnp.bfloat16

    # Pre-cast weights to bf16 once; fold 1/sqrt(d) into wq; fuse QKV.
    scale = 1.0 / float(D_tr) ** 0.5
    wqkv = jnp.concatenate([p['wq'] * scale, p['wk'], p['wv']], axis=1).astype(bf16)
    wproj = p['w_proj'].astype(bf16)
    wo = p['wo'].astype(bf16)
    w1 = p['w1'].astype(bf16)
    w2 = p['w2'].astype(bf16)
    whead = p['w_head'].astype(bf16)

    enc_b = enc_hidden.reshape(G, Bb, S, D_enc)
    valid_b = valid.reshape(G, Bb, S, 1)
    emb_b = emb.reshape(G, Bb, S, D_tr)

    full2 = lambda shp: pl.BlockSpec(shp, lambda g: (0, 0))

    logit3, hidden3 = pl.pallas_call(
        _transformer_head_kernel,
        out_shape=(jax.ShapeDtypeStruct((G, Bb, n_out), jnp.float32),
                   jax.ShapeDtypeStruct((G, Bb, D_tr), jnp.float32)),
        grid=(G,),
        in_specs=[
            pl.BlockSpec((None, Bb, S, D_enc), lambda g: (g, 0, 0, 0)),
            pl.BlockSpec((None, Bb, S, 1), lambda g: (g, 0, 0, 0)),
            pl.BlockSpec((None, Bb, S, D_tr), lambda g: (g, 0, 0, 0)),
            full2((1, D_enc)),
            full2((D_enc, D_tr)), full2((1, D_tr)),
            full2((D_tr, 3 * D_tr)),
            full2((D_tr, D_tr)),
            full2((D_tr, Dm)), full2((1, Dm)),
            full2((Dm, D_tr)), full2((1, D_tr)),
            full2((D_tr, n_out)), full2((1, n_out)),
        ],
        out_specs=(pl.BlockSpec((None, Bb, n_out), lambda g: (g, 0, 0)),
                   pl.BlockSpec((None, Bb, D_tr), lambda g: (g, 0, 0))),
        compiler_params=pltpu.CompilerParams(
            dimension_semantics=("parallel",),
            vmem_limit_bytes=32 * 1024 * 1024),
    )(enc_b, valid_b, emb_b,
      p['mask_tok'].reshape(1, D_enc),
      wproj, p['b_proj'].reshape(1, D_tr),
      wqkv, wo,
      w1, p['b1'].reshape(1, Dm), w2, p['b2'].reshape(1, D_tr),
      whead, p['b_head'].reshape(1, n_out))

    return logit3.reshape(B, n_out), hidden3.reshape(B, D_tr)


# ----------------------------------------------------------------------------
# Parameter construction (deterministic, synthetic — no checkpoint loading)
# ----------------------------------------------------------------------------

def make_params(key, *, C=3, C_enc=16, D_enc=128, D_tr=128, D_mlp=256,
                n_out=5, n_time=16, n_view=4, n_side=2):
    # TODO(synk): the original loads encoder/transformer weights via torch.load;
    # synthetic deterministic weights of equivalent structure are used instead.
    keys = jax.random.split(key, 16)
    s = 0.05
    return {
        # encoder: 3x3 conv (C -> C_enc) stored per-tap (9, C, C_enc), then FC.
        'w_conv': jax.random.normal(keys[0], (9, C, C_enc), jnp.float32) * s,
        'b_conv': jnp.zeros((C_enc,), jnp.float32),
        'w_fc':   jax.random.normal(keys[1], (C_enc, D_enc), jnp.float32) * s,
        'b_fc':   jnp.zeros((D_enc,), jnp.float32),
        # transformer: mask token, projection, embeddings, 1 block.
        'mask_tok': jax.random.normal(keys[2], (D_enc,), jnp.float32) * s,
        'w_proj': jax.random.normal(keys[3], (D_enc, D_tr), jnp.float32) * s,
        'b_proj': jnp.zeros((D_tr,), jnp.float32),
        'time_emb': jax.random.normal(keys[4], (n_time, D_tr), jnp.float32) * s,
        'view_emb': jax.random.normal(keys[5], (n_view, D_tr), jnp.float32) * s,
        'side_emb': jax.random.normal(keys[6], (n_side, D_tr), jnp.float32) * s,
        'wq': jax.random.normal(keys[7], (D_tr, D_tr), jnp.float32) * s,
        'wk': jax.random.normal(keys[8], (D_tr, D_tr), jnp.float32) * s,
        'wv': jax.random.normal(keys[9], (D_tr, D_tr), jnp.float32) * s,
        'wo': jax.random.normal(keys[10], (D_tr, D_tr), jnp.float32) * s,
        'w1': jax.random.normal(keys[11], (D_tr, D_mlp), jnp.float32) * s,
        'b1': jnp.zeros((D_mlp,), jnp.float32),
        'w2': jax.random.normal(keys[12], (D_mlp, D_tr), jnp.float32) * s,
        'b2': jnp.zeros((D_tr,), jnp.float32),
        # head: D_tr -> n_out hazard logits.
        'w_head': jax.random.normal(keys[13], (D_tr, n_out), jnp.float32) * s,
        'b_head': jnp.zeros((n_out,), jnp.float32),
    }


# ----------------------------------------------------------------------------
# Forward pass (mirrors MiraiChile.forward, standard path:
#   precompute_mode=False, use_precomputed_*=False, eval-mode dropout)
# ----------------------------------------------------------------------------

def mirai_chile_forward(params, x, batch):
    B, C, N, H, W = x.shape
    assert N == 4, "MiraiChile assumes 4 views (encoder_hidden.view(B, 4, -1))"
    BN = B * N
    HW = H * W
    C_enc = params['w_conv'].shape[-1]

    # x.transpose(1,2).view(B*N, C, H, W), then pre-pack im2col for the 3x3
    # "same" conv as a lane-dense bf16 tensor (tap*C along the contraction
    # axis, views folded into the lane axis per grid block).
    x_views = jnp.transpose(x, (0, 2, 1, 3, 4)).reshape(BN, C, H, W)
    xp = jnp.pad(x_views.astype(jnp.bfloat16), ((0, 0), (0, 0), (1, 1), (1, 1)))
    taps = [xp[:, :, dh:dh + H, dw:dw + W] for dh in range(3) for dw in range(3)]
    patches = jnp.stack(taps, axis=1).reshape(BN, 9 * C, HW)   # (BN, 9C, HW)

    Vb = _pick_block(BN, cap=16)           # views per grid step (grid >= 2 if possible)
    G1 = BN // Vb
    patches = (patches.reshape(G1, Vb, 9 * C, HW)
               .transpose(0, 2, 1, 3)
               .reshape(G1, 9 * C, Vb * HW))                   # (G1, 9C, Vb*HW)

    # Conv weight packed to a single dense bf16 (C_enc, 9*C) tile (tap*C order).
    w_conv2d = jnp.transpose(params['w_conv'], (2, 0, 1)).reshape(C_enc, 9 * C)
    w_conv2d = w_conv2d.astype(jnp.bfloat16)
    w_fc = params['w_fc'].astype(jnp.bfloat16)

    # Fused encoder kernel: conv + ReLU + avg-pool + FC + ReLU, Vb views/step.
    enc = encoder_forward(patches, w_conv2d,
                          params['b_conv'].reshape(C_enc, 1),
                          w_fc, params['b_fc'].reshape(1, -1),
                          Vb=Vb, HW=HW)                        # (BN, D_enc)
    D_enc = enc.shape[-1]
    encoder_hidden = enc.reshape(B, N, D_enc)

    # Sequence metadata: validity mask + summed time/view/side embeddings.
    view_seq = batch['view_seq']
    time_seq = batch['time_seq']
    side_seq = batch['side_seq']
    valid = (view_seq >= 0).astype(jnp.float32)[..., None]      # (B, 4, 1)
    nt = params['time_emb'].shape[0]
    nv = params['view_emb'].shape[0]
    ns = params['side_emb'].shape[0]
    emb = (jnp.take(params['time_emb'], jnp.clip(time_seq, 0, nt - 1), axis=0)
           + jnp.take(params['view_emb'], jnp.clip(view_seq, 0, nv - 1), axis=0)
           + jnp.take(params['side_emb'], jnp.clip(side_seq, 0, ns - 1), axis=0))

    # Fused transformer + pool + head kernel, Bb batch elements per grid step.
    Bb = _pick_block(B, cap=64)
    logit, transformer_hidden = transformer_head_forward(
        encoder_hidden, valid, emb, params, Bb=Bb)

    return logit, transformer_hidden, encoder_hidden.reshape(B, -1)


# ----------------------------------------------------------------------------

if __name__ == "__main__":
    key = jax.random.PRNGKey(0)
    pkey, xkey = jax.random.split(key)

    B, C, N, H, W = 2, 3, 4, 16, 16
    params = make_params(pkey, C=C)

    x = jax.random.normal(xkey, (B, C, N, H, W), jnp.float32)
    batch = {
        'time_seq': jnp.tile(jnp.arange(4, dtype=jnp.int32), (B, 1)),
        'view_seq': jnp.tile(jnp.arange(4, dtype=jnp.int32), (B, 1)),
        'side_seq': jnp.tile(jnp.array([0, 0, 1, 1], dtype=jnp.int32), (B, 1)),
    }

    logit, transformer_hidden, encoder_hidden_flat = jax.jit(
        mirai_chile_forward)(params, x, batch)
    jax.block_until_ready((logit, transformer_hidden, encoder_hidden_flat))

    assert logit.shape == (B, 5)
    assert transformer_hidden.shape == (B, 128)
    assert encoder_hidden_flat.shape == (B, 4 * 128)
    print("KERNEL_OK")
</pallas_src>

<mosaic_0001>
module attributes {stable_mosaic.version = 11 : i64} {
  func.func @_encoder_kernel(%arg0: i32, %arg1: memref<1x27x1024xbf16, #tpu.memory_space<vmem>>, %arg2: memref<16x27xbf16, #tpu.memory_space<vmem>>, %arg3: memref<16x1xf32, #tpu.memory_space<vmem>>, %arg4: memref<16x128xbf16, #tpu.memory_space<vmem>>, %arg5: memref<1x128xf32, #tpu.memory_space<vmem>>, %arg6: memref<1x4x128xf32, #tpu.memory_space<vmem>>) attributes {dimension_semantics = [#tpu.dimension_semantics<parallel>], iteration_bounds = array<i64: 2>, scalar_prefetch = 0 : i64, scratch_operands = 0 : i64, tpu.core_type = #tpu.core_type<tc>, window_params = [{transform_indices = @transform_0, window_bounds = array<i64: 1, 27, 1024>}, {pipeline_mode = #tpu.pipeline_mode<synchronous>, transform_indices = @transform_1, window_bounds = array<i64: 16, 27>}, {pipeline_mode = #tpu.pipeline_mode<synchronous>, transform_indices = @transform_2, window_bounds = array<i64: 16, 1>}, {pipeline_mode = #tpu.pipeline_mode<synchronous>, transform_indices = @transform_3, window_bounds = array<i64: 16, 128>}, {pipeline_mode = #tpu.pipeline_mode<synchronous>, transform_indices = @transform_4, window_bounds = array<i64: 1, 128>}, {transform_indices = @transform_5, window_bounds = array<i64: 1, 4, 128>}]} {
    %c0 = arith.constant 0 : index
    %c0_0 = arith.constant 0 : index
    %0 = vector.load %arg2[%c0, %c0_0] : memref<16x27xbf16, #tpu.memory_space<vmem>>, vector<16x27xbf16>
    %c0_1 = arith.constant 0 : index
    %c0_2 = arith.constant 0 : index
    %c0_3 = arith.constant 0 : index
    %1 = vector.load %arg1[%c0_1, %c0_2, %c0_3] : memref<1x27x1024xbf16, #tpu.memory_space<vmem>>, vector<1x27x1024xbf16>
    %2 = vector.shape_cast %1 : vector<1x27x1024xbf16> to vector<27x1024xbf16>
    %cst = arith.constant dense<0.000000e+00> : vector<16x1024xf32>
    %3 = tpu.matmul %0, %2, %cst {dimension_numbers = #tpu.dot_dimension_numbers<[1], [0], [0], [1], [0, 0, 1, 1], [], []>} : vector<16x27xbf16>, vector<27x1024xbf16>, vector<16x1024xf32> -> vector<16x1024xf32>
    %c0_4 = arith.constant 0 : index
    %c0_5 = arith.constant 0 : index
    %4 = vector.load %arg3[%c0_4, %c0_5] : memref<16x1xf32, #tpu.memory_space<vmem>>, vector<16x1xf32>
    %5 = vector.broadcast %4 : vector<16x1xf32> to vector<16x1024xf32>
    %6 = arith.addf %3, %5 : vector<16x1024xf32>
    %cst_6 = arith.constant 0.000000e+00 : f32
    %7 = vector.broadcast %cst_6 : f32 to vector<16x1024xf32>
    %8 = arith.maximumf %6, %7 : vector<16x1024xf32>
    %9 = vector.shape_cast %8 : vector<16x1024xf32> to vector<16x4x256xf32>
    %cst_7 = arith.constant dense<0.000000e+00> : vector<16x4xf32>
    %10 = vector.multi_reduction <add>, %9, %cst_7 [2] : vector<16x4x256xf32> to vector<16x4xf32>
    %cst_8 = arith.constant 3.906250e-03 : f32
    %11 = vector.broadcast %cst_8 : f32 to vector<16x4xf32>
    %12 = arith.mulf %10, %11 : vector<16x4xf32>
    %13 = arith.truncf %12 : vector<16x4xf32> to vector<16x4xbf16>
    %c0_9 = arith.constant 0 : index
    %c0_10 = arith.constant 0 : index
    %14 = vector.load %arg4[%c0_9, %c0_10] : memref<16x128xbf16, #tpu.memory_space<vmem>>, vector<16x128xbf16>
    "tpu.trace_start"() <{level = 10 : i32, message = "cv,cd->vd"}> : () -> ()
    %cst_11 = arith.constant dense<0.000000e+00> : vector<4x128xf32>
    %15 = tpu.matmul %13, %14, %cst_11 {dimension_numbers = #tpu.dot_dimension_numbers<[0], [0], [1], [1], [0, 1, 1, 1], [], []>} : vector<16x4xbf16>, vector<16x128xbf16>, vector<4x128xf32> -> vector<4x128xf32>
    "tpu.trace_stop"() : () -> ()
    %c0_12 = arith.constant 0 : index
    %c0_13 = arith.constant 0 : index
    %16 = vector.load %arg5[%c0_12, %c0_13] : memref<1x128xf32, #tpu.memory_space<vmem>>, vector<1x128xf32>
    %17 = vector.broadcast %16 : vector<1x128xf32> to vector<4x128xf32>
    %18 = arith.addf %15, %17 : vector<4x128xf32>
    %cst_14 = arith.constant 0.000000e+00 : f32
    %19 = vector.broadcast %cst_14 : f32 to vector<4x128xf32>
    %20 = arith.maximumf %18, %19 : vector<4x128xf32>
    %c0_15 = arith.constant 0 : index
    %c0_16 = arith.constant 0 : index
    %c0_17 = arith.constant 0 : index
    %21 = vector.load %arg6[%c0_15, %c0_16, %c0_17] : memref<1x4x128xf32, #tpu.memory_space<vmem>>, vector<1x4x128xf32>
    %22 = vector.shape_cast %21 : vector<1x4x128xf32> to vector<4x128xf32>
    %23 = vector.shape_cast %20 : vector<4x128xf32> to vector<1x4x128xf32>
    tpu.vector_store %arg6[%c0_15, %c0_16, %c0_17], %23 {strides = array<i32>} : memref<1x4x128xf32, #tpu.memory_space<vmem>>, vector<1x4x128xf32>,
    return
  }
  func.func @transform_0(%arg0: i32) -> (i32, i32, i32) {
    %c0_i32 = arith.constant 0 : i32
    %c0_i32_0 = arith.constant 0 : i32
    %c0_i32_1 = arith.constant 0 : i32
    return %arg0, %c0_i32, %c0_i32_0 : i32, i32, i32
  }
  func.func @transform_1(%arg0: i32) -> (i32, i32) {
    %c0_i32 = arith.constant 0 : i32
    %c0_i32_0 = arith.constant 0 : i32
    %c0_i32_1 = arith.constant 0 : i32
    return %c0_i32, %c0_i32_0 : i32, i32
  }
  func.func @transform_2(%arg0: i32) -> (i32, i32) {
    %c0_i32 = arith.constant 0 : i32
    %c0_i32_0 = arith.constant 0 : i32
    %c0_i32_1 = arith.constant 0 : i32
    return %c0_i32, %c0_i32_0 : i32, i32
  }
  func.func @transform_3(%arg0: i32) -> (i32, i32) {
    %c0_i32 = arith.constant 0 : i32
    %c0_i32_0 = arith.constant 0 : i32
    %c0_i32_1 = arith.constant 0 : i32
    return %c0_i32, %c0_i32_0 : i32, i32
  }
  func.func @transform_4(%arg0: i32) -> (i32, i32) {
    %c0_i32 = arith.constant 0 : i32
    %c0_i32_0 = arith.constant 0 : i32
    %c0_i32_1 = arith.constant 0 : i32
    return %c0_i32, %c0_i32_0 : i32, i32
  }
  func.func @transform_5(%arg0: i32) -> (i32, i32, i32) {
    %c0_i32 = arith.constant 0 : i32
    %c0_i32_0 = arith.constant 0 : i32
    %c0_i32_1 = arith.constant 0 : i32
    return %arg0, %c0_i32, %c0_i32_0 : i32, i32, i32
  }
}

module attributes {stable_mosaic.version = 11 : i64} {
  func.func @_transformer_head_kernel(%arg0: i32, %arg1: memref<1x1x4x128xf32, #tpu.memory_space<vmem>>, %arg2: memref<1x1x4x1xf32, #tpu.memory_space<vmem>>, %arg3: memref<1x1x4x128xf32, #tpu.memory_space<vmem>>, %arg4: memref<1x128xf32, #tpu.memory_space<vmem>>, %arg5: memref<128x128xbf16, #tpu.memory_space<vmem>>, %arg6: memref<1x128xf32, #tpu.memory_space<vmem>>, %arg7: memref<128x384xbf16, #tpu.memory_space<vmem>>, %arg8: memref<128x128xbf16, #tpu.memory_space<vmem>>, %arg9: memref<128x256xbf16, #tpu.memory_space<vmem>>, %arg10: memref<1x256xf32, #tpu.memory_space<vmem>>, %arg11: memref<256x128xbf16, #tpu.memory_space<vmem>>, %arg12: memref<1x128xf32, #tpu.memory_space<vmem>>, %arg13: memref<128x5xbf16, #tpu.memory_space<vmem>>, %arg14: memref<1x5xf32, #tpu.memory_space<vmem>>, %arg15: memref<1x1x5xf32, #tpu.memory_space<vmem>>, %arg16: memref<1x1x128xf32, #tpu.memory_space<vmem>>) attributes {dimension_semantics = [#tpu.dimension_semantics<parallel>], iteration_bounds = array<i64: 2>, scalar_prefetch = 0 : i64, scratch_operands = 0 : i64, tpu.core_type = #tpu.core_type<tc>, window_params = [{transform_indices = @transform_0, window_bounds = array<i64: 1, 1, 4, 128>}, {transform_indices = @transform_1, window_bounds = array<i64: 1, 1, 4, 1>}, {transform_indices = @transform_2, window_bounds = array<i64: 1, 1, 4, 128>}, {pipeline_mode = #tpu.pipeline_mode<synchronous>, transform_indices = @transform_3, window_bounds = array<i64: 1, 128>}, {pipeline_mode = #tpu.pipeline_mode<synchronous>, transform_indices = @transform_4, window_bounds = array<i64: 128, 128>}, {pipeline_mode = #tpu.pipeline_mode<synchronous>, transform_indices = @transform_5, window_bounds = array<i64: 1, 128>}, {pipeline_mode = #tpu.pipeline_mode<synchronous>, transform_indices = @transform_6, window_bounds = array<i64: 128, 384>}, {pipeline_mode = #tpu.pipeline_mode<synchronous>, transform_indices = @transform_7, window_bounds = array<i64: 128, 128>}, {pipeline_mode = #tpu.pipeline_mode<synchronous>, transform_indices = @transform_8, window_bounds = array<i64: 128, 256>}, {pipeline_mode = #tpu.pipeline_mode<synchronous>, transform_indices = @transform_9, window_bounds = array<i64: 1, 256>}, {pipeline_mode = #tpu.pipeline_mode<synchronous>, transform_indices = @transform_10, window_bounds = array<i64: 256, 128>}, {pipeline_mode = #tpu.pipeline_mode<synchronous>, transform_indices = @transform_11, window_bounds = array<i64: 1, 128>}, {pipeline_mode = #tpu.pipeline_mode<synchronous>, transform_indices = @transform_12, window_bounds = array<i64: 128, 5>}, {pipeline_mode = #tpu.pipeline_mode<synchronous>, transform_indices = @transform_13, window_bounds = array<i64: 1, 5>}, {transform_indices = @transform_14, window_bounds = array<i64: 1, 1, 5>}, {transform_indices = @transform_15, window_bounds = array<i64: 1, 1, 128>}]} {
    %c0 = arith.constant 0 : index
    %c0_0 = arith.constant 0 : index
    %c0_1 = arith.constant 0 : index
    %c0_2 = arith.constant 0 : index
    %0 = vector.load %arg1[%c0, %c0_0, %c0_1, %c0_2] : memref<1x1x4x128xf32, #tpu.memory_space<vmem>>, vector<1x1x4x128xf32>
    %1 = vector.shape_cast %0 : vector<1x1x4x128xf32> to vector<1x4x128xf32>
    %c0_3 = arith.constant 0 : index
    %c0_4 = arith.constant 0 : index
    %c0_5 = arith.constant 0 : index
    %c0_6 = arith.constant 0 : index
    %2 = vector.load %arg2[%c0_3, %c0_4, %c0_5, %c0_6] : memref<1x1x4x1xf32, #tpu.memory_space<vmem>>, vector<1x1x4x1xf32>
    %3 = vector.shape_cast %2 : vector<1x1x4x1xf32> to vector<1x4x1xf32>
    %4 = vector.broadcast %3 : vector<1x4x1xf32> to vector<1x4x128xf32>
    %5 = arith.mulf %4, %1 : vector<1x4x128xf32>
    %cst = arith.constant 1.000000e+00 : f32
    %6 = vector.broadcast %cst : f32 to vector<1x4x1xf32>
    %7 = arith.subf %6, %3 : vector<1x4x1xf32>
    %c0_7 = arith.constant 0 : index
    %c0_8 = arith.constant 0 : index
    %8 = vector.load %arg4[%c0_7, %c0_8] : memref<1x128xf32, #tpu.memory_space<vmem>>, vector<1x128xf32>
    %9 = vector.shape_cast %8 : vector<1x128xf32> to vector<1x1x128xf32>
    %10 = vector.broadcast %7 : vector<1x4x1xf32> to vector<1x4x128xf32>
    %11 = vector.broadcast %9 : vector<1x1x128xf32> to vector<1x4x128xf32>
    %12 = arith.mulf %10, %11 : vector<1x4x128xf32>
    %13 = arith.addf %5, %12 : vector<1x4x128xf32>
    %14 = vector.shape_cast %13 : vector<1x4x128xf32> to vector<4x128xf32>
    %15 = arith.truncf %14 : vector<4x128xf32> to vector<4x128xbf16>
    %c0_9 = arith.constant 0 : index
    %c0_10 = arith.constant 0 : index
    %16 = vector.load %arg5[%c0_9, %c0_10] : memref<128x128xbf16, #tpu.memory_space<vmem>>, vector<128x128xbf16>
    %cst_11 = arith.constant dense<0.000000e+00> : vector<4x128xf32>
    %17 = tpu.matmul %15, %16, %cst_11 {dimension_numbers = #tpu.dot_dimension_numbers<[1], [0], [0], [1], [0, 0, 1, 1], [], []>} : vector<4x128xbf16>, vector<128x128xbf16>, vector<4x128xf32> -> vector<4x128xf32>
    %c0_12 = arith.constant 0 : index
    %c0_13 = arith.constant 0 : index
    %18 = vector.load %arg6[%c0_12, %c0_13] : memref<1x128xf32, #tpu.memory_space<vmem>>, vector<1x128xf32>
    %19 = vector.broadcast %18 : vector<1x128xf32> to vector<4x128xf32>
    %20 = arith.addf %17, %19 : vector<4x128xf32>
    %c0_14 = arith.constant 0 : index
    %c0_15 = arith.constant 0 : index
    %c0_16 = arith.constant 0 : index
    %c0_17 = arith.constant 0 : index
    %21 = vector.load %arg3[%c0_14, %c0_15, %c0_16, %c0_17] : memref<1x1x4x128xf32, #tpu.memory_space<vmem>>, vector<1x1x4x128xf32>
    %22 = vector.shape_cast %21 : vector<1x1x4x128xf32> to vector<1x4x128xf32>
    %23 = vector.shape_cast %22 : vector<1x4x128xf32> to vector<4x128xf32>
    %24 = arith.addf %20, %23 : vector<4x128xf32>
    %25 = arith.truncf %24 : vector<4x128xf32> to vector<4x128xbf16>
    %c0_18 = arith.constant 0 : index
    %c0_19 = arith.constant 0 : index
    %26 = vector.load %arg7[%c0_18, %c0_19] : memref<128x384xbf16, #tpu.memory_space<vmem>>, vector<128x384xbf16>
    %cst_20 = arith.constant dense<0.000000e+00> : vector<4x384xf32>
    %27 = tpu.matmul %25, %26, %cst_20 {dimension_numbers = #tpu.dot_dimension_numbers<[1], [0], [0], [1], [0, 0, 1, 1], [], []>} : vector<4x128xbf16>, vector<128x384xbf16>, vector<4x384xf32> -> vector<4x384xf32>
    %28 = vector.extract_strided_slice %27 {offsets = [0, 0], sizes = [4, 128], strides = [1, 1]} : vector<4x384xf32> to vector<4x128xf32>
    %29 = vector.shape_cast %28 : vector<4x128xf32> to vector<1x4x128xf32>
    %30 = vector.extract_strided_slice %27 {offsets = [0, 128], sizes = [4, 128], strides = [1, 1]} : vector<4x384xf32> to vector<4x128xf32>
    %31 = vector.shape_cast %30 : vector<4x128xf32> to vector<1x4x128xf32>
    %32 = vector.extract_strided_slice %27 {offsets = [0, 256], sizes = [4, 128], strides = [1, 1]} : vector<4x384xf32> to vector<4x128xf32>
    %33 = vector.shape_cast %32 : vector<4x128xf32> to vector<1x4x128xf32>
    %34 = arith.truncf %29 : vector<1x4x128xf32> to vector<1x4x128xbf16>
    %35 = arith.truncf %31 : vector<1x4x128xf32> to vector<1x4x128xbf16>
    "tpu.trace_start"() <{level = 10 : i32, message = "bsd,btd->bst"}> : () -> ()
    %cst_21 = arith.constant dense<0.000000e+00> : vector<1x4x4xf32>
    %36 = tpu.matmul %34, %35, %cst_21 {dimension_numbers = #tpu.dot_dimension_numbers<[2], [2], [1], [1], [0, 0, 0, 1, 1, 1], [0], [0]>} : vector<1x4x128xbf16>, vector<1x4x128xbf16>, vector<1x4x4xf32> -> vector<1x4x4xf32>
    "tpu.trace_stop"() : () -> ()
    %cst_22 = arith.constant dense<0xFF800000> : vector<1x4xf32>
    %37 = vector.multi_reduction <maximumf>, %36, %cst_22 [2] : vector<1x4x4xf32> to vector<1x4xf32>
    %38 = vector.shape_cast %37 : vector<1x4xf32> to vector<1x4x1xf32>
    %39 = vector.broadcast %38 : vector<1x4x1xf32> to vector<1x4x4xf32>
    %40 = arith.subf %36, %39 : vector<1x4x4xf32>
    %41 = math.exp %40 : vector<1x4x4xf32>
    %cst_23 = arith.constant dense<0.000000e+00> : vector<1x4xf32>
    %42 = vector.multi_reduction <add>, %41, %cst_23 [2] : vector<1x4x4xf32> to vector<1x4xf32>
    %43 = vector.shape_cast %42 : vector<1x4xf32> to vector<1x4x1xf32>
    %44 = tpu.reciprocal %43 {approx = true} : vector<1x4x1xf32> -> vector<1x4x1xf32>
    %45 = vector.broadcast %44 : vector<1x4x1xf32> to vector<1x4x4xf32>
    %46 = arith.mulf %41, %45 : vector<1x4x4xf32>
    %47 = arith.truncf %46 : vector<1x4x4xf32> to vector<1x4x4xbf16>
    %48 = arith.truncf %33 : vector<1x4x128xf32> to vector<1x4x128xbf16>
    "tpu.trace_start"() <{level = 10 : i32, message = "bst,btd->bsd"}> : () -> ()
    %cst_24 = arith.constant dense<0.000000e+00> : vector<1x4x128xf32>
    %49 = tpu.matmul %47, %48, %cst_24 {dimension_numbers = #tpu.dot_dimension_numbers<[2], [1], [1], [2], [0, 0, 0, 1, 1, 2], [0], [0]>} : vector<1x4x4xbf16>, vector<1x4x128xbf16>, vector<1x4x128xf32> -> vector<1x4x128xf32>
    "tpu.trace_stop"() : () -> ()
    %50 = vector.shape_cast %49 : vector<1x4x128xf32> to vector<4x128xf32>
    %51 = arith.truncf %50 : vector<4x128xf32> to vector<4x128xbf16>
    %c0_25 = arith.constant 0 : index
    %c0_26 = arith.constant 0 : index
    %52 = vector.load %arg8[%c0_25, %c0_26] : memref<128x128xbf16, #tpu.memory_space<vmem>>, vector<128x128xbf16>
    %cst_27 = arith.constant dense<0.000000e+00> : vector<4x128xf32>
    %53 = tpu.matmul %51, %52, %cst_27 {dimension_numbers = #tpu.dot_dimension_numbers<[1], [0], [0], [1], [0, 0, 1, 1], [], []>} : vector<4x128xbf16>, vector<128x128xbf16>, vector<4x128xf32> -> vector<4x128xf32>
    %54 = arith.addf %24, %53 : vector<4x128xf32>
    %55 = arith.truncf %54 : vector<4x128xf32> to vector<4x128xbf16>
    %c0_28 = arith.constant 0 : index
    %c0_29 = arith.constant 0 : index
    %56 = vector.load %arg9[%c0_28, %c0_29] : memref<128x256xbf16, #tpu.memory_space<vmem>>, vector<128x256xbf16>
    %cst_30 = arith.constant dense<0.000000e+00> : vector<4x256xf32>
    %57 = tpu.matmul %55, %56, %cst_30 {dimension_numbers = #tpu.dot_dimension_numbers<[1], [0], [0], [1], [0, 0, 1, 1], [], []>} : vector<4x128xbf16>, vector<128x256xbf16>, vector<4x256xf32> -> vector<4x256xf32>
    %c0_31 = arith.constant 0 : index
    %c0_32 = arith.constant 0 : index
    %58 = vector.load %arg10[%c0_31, %c0_32] : memref<1x256xf32, #tpu.memory_space<vmem>>, vector<1x256xf32>
    %59 = vector.broadcast %58 : vector<1x256xf32> to vector<4x256xf32>
    %60 = arith.addf %57, %59 : vector<4x256xf32>
    %cst_33 = arith.constant 0.000000e+00 : f32
    %61 = vector.broadcast %cst_33 : f32 to vector<4x256xf32>
    %62 = arith.maximumf %60, %61 : vector<4x256xf32>
    %63 = arith.truncf %62 : vector<4x256xf32> to vector<4x256xbf16>
    %c0_34 = arith.constant 0 : index
    %c0_35 = arith.constant 0 : index
    %64 = vector.load %arg11[%c0_34, %c0_35] : memref<256x128xbf16, #tpu.memory_space<vmem>>, vector<256x128xbf16>
    %cst_36 = arith.constant dense<0.000000e+00> : vector<4x128xf32>
    %65 = tpu.matmul %63, %64, %cst_36 {dimension_numbers = #tpu.dot_dimension_numbers<[1], [0], [0], [1], [0, 0, 1, 1], [], []>} : vector<4x256xbf16>, vector<256x128xbf16>, vector<4x128xf32> -> vector<4x128xf32>
    %66 = arith.addf %54, %65 : vector<4x128xf32>
    %c0_37 = arith.constant 0 : index
    %c0_38 = arith.constant 0 : index
    %67 = vector.load %arg12[%c0_37, %c0_38] : memref<1x128xf32, #tpu.memory_space<vmem>>, vector<1x128xf32>
    %68 = vector.broadcast %67 : vector<1x128xf32> to vector<4x128xf32>
    %69 = arith.addf %66, %68 : vector<4x128xf32>
    %70 = vector.shape_cast %69 : vector<4x128xf32> to vector<1x4x128xf32>
    %cst_39 = arith.constant dense<0xFF800000> : vector<1x128xf32>
    %71 = vector.multi_reduction <maximumf>, %70, %cst_39 [1] : vector<1x4x128xf32> to vector<1x128xf32>
    %cst_40 = arith.constant 0.000000e+00 : f32
    %72 = vector.broadcast %cst_40 : f32 to vector<1x128xf32>
    %73 = arith.maximumf %71, %72 : vector<1x128xf32>
    %74 = arith.truncf %73 : vector<1x128xf32> to vector<1x128xbf16>
    %c0_41 = arith.constant 0 : index
    %c0_42 = arith.constant 0 : index
    %75 = vector.load %arg13[%c0_41, %c0_42] : memref<128x5xbf16, #tpu.memory_space<vmem>>, vector<128x5xbf16>
    %cst_43 = arith.constant dense<0.000000e+00> : vector<1x5xf32>
    %76 = tpu.matmul %74, %75, %cst_43 {dimension_numbers = #tpu.dot_dimension_numbers<[1], [0], [0], [1], [0, 0, 1, 1], [], []>} : vector<1x128xbf16>, vector<128x5xbf16>, vector<1x5xf32> -> vector<1x5xf32>
    %c0_44 = arith.constant 0 : index
    %c0_45 = arith.constant 0 : index
    %77 = vector.load %arg14[%c0_44, %c0_45] : memref<1x5xf32, #tpu.memory_space<vmem>>, vector<1x5xf32>
    %78 = arith.addf %76, %77 : vector<1x5xf32>
    %c0_46 = arith.constant 0 : index
    %c0_47 = arith.constant 0 : index
    %c0_48 = arith.constant 0 : index
    %79 = vector.load %arg16[%c0_46, %c0_47, %c0_48] : memref<1x1x128xf32, #tpu.memory_space<vmem>>, vector<1x1x128xf32>
    %80 = vector.shape_cast %79 : vector<1x1x128xf32> to vector<1x128xf32>
    %81 = vector.shape_cast %73 : vector<1x128xf32> to vector<1x1x128xf32>
    tpu.vector_store %arg16[%c0_46, %c0_47, %c0_48], %81 {strides = array<i32>} : memref<1x1x128xf32, #tpu.memory_space<vmem>>, vector<1x1x128xf32>,
    %c0_49 = arith.constant 0 : index
    %c0_50 = arith.constant 0 : index
    %c0_51 = arith.constant 0 : index
    %82 = vector.load %arg15[%c0_49, %c0_50, %c0_51] : memref<1x1x5xf32, #tpu.memory_space<vmem>>, vector<1x1x5xf32>
    %83 = vector.shape_cast %82 : vector<1x1x5xf32> to vector<1x5xf32>
    %84 = vector.shape_cast %78 : vector<1x5xf32> to vector<1x1x5xf32>
    tpu.vector_store %arg15[%c0_49, %c0_50, %c0_51], %84 {strides = array<i32>} : memref<1x1x5xf32, #tpu.memory_space<vmem>>, vector<1x1x5xf32>,
    return
  }
  func.func @transform_0(%arg0: i32) -> (i32, i32, i32, i32) {
    %c0_i32 = arith.constant 0 : i32
    %c0_i32_0 = arith.constant 0 : i32
    %c0_i32_1 = arith.constant 0 : i32
    %c0_i32_2 = arith.constant 0 : i32
    return %arg0, %c0_i32, %c0_i32_0, %c0_i32_1 : i32, i32, i32, i32
  }
  func.func @transform_1(%arg0: i32) -> (i32, i32, i32, i32) {
    %c0_i32 = arith.constant 0 : i32
    %c0_i32_0 = arith.constant 0 : i32
    %c0_i32_1 = arith.constant 0 : i32
    %c0_i32_2 = arith.constant 0 : i32
    return %arg0, %c0_i32, %c0_i32_0, %c0_i32_1 : i32, i32, i32, i32
  }
  func.func @transform_2(%arg0: i32) -> (i32, i32, i32, i32) {
    %c0_i32 = arith.constant 0 : i32
    %c0_i32_0 = arith.constant 0 : i32
    %c0_i32_1 = arith.constant 0 : i32
    %c0_i32_2 = arith.constant 0 : i32
    return %arg0, %c0_i32, %c0_i32_0, %c0_i32_1 : i32, i32, i32, i32
  }
  func.func @transform_3(%arg0: i32) -> (i32, i32) {
    %c0_i32 = arith.constant 0 : i32
    %c0_i32_0 = arith.constant 0 : i32
    %c0_i32_1 = arith.constant 0 : i32
    return %c0_i32, %c0_i32_0 : i32, i32
  }
  func.func @transform_4(%arg0: i32) -> (i32, i32) {
    %c0_i32 = arith.constant 0 : i32
    %c0_i32_0 = arith.constant 0 : i32
    %c0_i32_1 = arith.constant 0 : i32
    return %c0_i32, %c0_i32_0 : i32, i32
  }
  func.func @transform_5(%arg0: i32) -> (i32, i32) {
    %c0_i32 = arith.constant 0 : i32
    %c0_i32_0 = arith.constant 0 : i32
    %c0_i32_1 = arith.constant 0 : i32
    return %c0_i32, %c0_i32_0 : i32, i32
  }
  func.func @transform_6(%arg0: i32) -> (i32, i32) {
    %c0_i32 = arith.constant 0 : i32
    %c0_i32_0 = arith.constant 0 : i32
    %c0_i32_1 = arith.constant 0 : i32
    return %c0_i32, %c0_i32_0 : i32, i32
  }
  func.func @transform_7(%arg0: i32) -> (i32, i32) {
    %c0_i32 = arith.constant 0 : i32
    %c0_i32_0 = arith.constant 0 : i32
    %c0_i32_1 = arith.constant 0 : i32
    return %c0_i32, %c0_i32_0 : i32, i32
  }
  func.func @transform_8(%arg0: i32) -> (i32, i32) {
    %c0_i32 = arith.constant 0 : i32
    %c0_i32_0 = arith.constant 0 : i32
    %c0_i32_1 = arith.constant 0 : i32
    return %c0_i32, %c0_i32_0 : i32, i32
  }
  func.func @transform_9(%arg0: i32) -> (i32, i32) {
    %c0_i32 = arith.constant 0 : i32
    %c0_i32_0 = arith.constant 0 : i32
    %c0_i32_1 = arith.constant 0 : i32
    return %c0_i32, %c0_i32_0 : i32, i32
  }
  func.func @transform_10(%arg0: i32) -> (i32, i32) {
    %c0_i32 = arith.constant 0 : i32
    %c0_i32_0 = arith.constant 0 : i32
    %c0_i32_1 = arith.constant 0 : i32
    return %c0_i32, %c0_i32_0 : i32, i32
  }
  func.func @transform_11(%arg0: i32) -> (i32, i32) {
    %c0_i32 = arith.constant 0 : i32
    %c0_i32_0 = arith.constant 0 : i32
    %c0_i32_1 = arith.constant 0 : i32
    return %c0_i32, %c0_i32_0 : i32, i32
  }
  func.func @transform_12(%arg0: i32) -> (i32, i32) {
    %c0_i32 = arith.constant 0 : i32
    %c0_i32_0 = arith.constant 0 : i32
    %c0_i32_1 = arith.constant 0 : i32
    return %c0_i32, %c0_i32_0 : i32, i32
  }
  func.func @transform_13(%arg0: i32) -> (i32, i32) {
    %c0_i32 = arith.constant 0 : i32
    %c0_i32_0 = arith.constant 0 : i32
    %c0_i32_1 = arith.constant 0 : i32
    return %c0_i32, %c0_i32_0 : i32, i32
  }
  func.func @transform_14(%arg0: i32) -> (i32, i32, i32) {
    %c0_i32 = arith.constant 0 : i32
    %c0_i32_0 = arith.constant 0 : i32
    %c0_i32_1 = arith.constant 0 : i32
    return %arg0, %c0_i32, %c0_i32_0 : i32, i32, i32
  }
  func.func @transform_15(%arg0: i32) -> (i32, i32, i32) {
    %c0_i32 = arith.constant 0 : i32
    %c0_i32_0 = arith.constant 0 : i32
    %c0_i32_1 = arith.constant 0 : i32
    return %arg0, %c0_i32, %c0_i32_0 : i32, i32, i32
  }
}

</mosaic_0001>

<llo_original>
// kernel: mirai_chile_forward.2
$region0: #{mirai_chile_forward.2}
  #allocation0 [shape = 'u32[]', space=smem, size = 0x4, offset = 0x4, fixed_abs, tag = 'smem constant byte address 0x4 - core index']
  #allocation1 [shape = 'u32[72,128]{1,0:T(1,128)}', space=vmem, size = 0x9000, scoped, tag = 'internal scratch']
  %s0 = inlined_call_operand.vmem [shape: bf16[2,27,1024], index: 0, kind: input, shape index: {}]
  %s1 = inlined_call_operand.vmem [shape: bf16[16,27], index: 1, kind: input, shape index: {}]
  %s2 = inlined_call_operand.vmem [shape: f32[16,1], index: 2, kind: input, shape index: {}]
  %s3 = inlined_call_operand.vmem [shape: bf16[16,128], index: 3, kind: input, shape index: {}]
  %s4 = inlined_call_operand.vmem [shape: f32[1,128], index: 4, kind: input, shape index: {}]
  %s5 = inlined_call_operand.vmem [shape: f32[2,4,128], index: 5, kind: output, shape index: {}]
  %s6 = sld [smem:[#allocation0]]
  $region53: #{mirai_chile_forward.2} parent=0
    _
  %s8 = ssub.s32 1, %s6
  %s9 = scalar_select 0, %s8, %s6
  loop: start=0, step=1, limit=4
  $region2: #{mirai_chile_forward.2} parent=0 // loop_pre_header
    _
  $region3: #{mirai_chile_forward.2} parent=0 // loop_header
    %s11 = sphi 0, %s15
    %p12 = scmp.ge.s32.totalorder %s11, 4
    %s21 = sphi 0, %s23
    %s24 = sphi 0, %s21
    %s25 = sphi 0, %s24
    %s41 = sphi 0, %s25
    %s45 = sphi 0, %s45
    %s47 = sphi 0, %s45
    %s48 = sphi 0, %s47
    %s62 = sphi 0, %s48
    %s66 = sphi 0, %s66
    %s68 = sphi 0, %s66
    %s69 = sphi 0, %s68
    %s83 = sphi 0, %s69
    %s87 = sphi 0, %s87
    %s89 = sphi 0, %s87
    %s90 = sphi 0, %s89
    %s104 = sphi 0, %s90
    %s108 = sphi 0, %s108
    %s110 = sphi 0, %s108
    %s111 = sphi 0, %s110
    %s125 = sphi 0, %s111
    %s131 = sphi 0, %s133
    %s134 = sphi 0, %s131
    %s135 = sphi 0, %s134
    %s151 = sphi 0, %s135
  $region4: #{mirai_chile_forward.2} parent=0 // loop_header_branch
    %14 = sbr.rel (%p12) target = $region8
  $region5: #{mirai_chile_forward.2} parent=0 // loop_body
    %s16 = ssub.s32 %s11, 1
    %s17 = ssub.s32 %s11, 2
    %s18 = sadd.s32 %s11, 1
    %s19 = ssub.s32 %s11, %s18
    %p20 = scmp.eq.s32.totalorder %s19, 0
    %s22 = sadd.s32 %s21, 1
    %s23 = scalar_select %p20, %s21, %s22
    %p26 = pneg %p20
    %p27 = scmp.eq.s32.totalorder %s11, 1
    %p28 = por %p26, %p27
    %p29 = scmp.ne.s32.totalorder %s21, %s24
    %p30 = scmp.eq.s32.totalorder %s11, 0
    %p31 = por %p29, %p30
    %p32 = scmp.ne.s32.totalorder %s21, %s24
    %p33 = scmp.eq.s32.totalorder %s16, 1
    %p34 = por %p32, %p33
    %p35 = scmp.ne.s32.totalorder %s24, %s25
    %p36 = scmp.eq.s32.totalorder %s16, 0
    %p37 = por %p35, %p36
    %p38 = scmp.ne.s32.totalorder %s24, %s25
    %p39 = scmp.eq.s32.totalorder %s17, 1
    %p40 = por %p38, %p39
    %p42 = scmp.ne.s32.totalorder %s25, %s41
    %p43 = scmp.eq.s32.totalorder %s17, 0
    %p44 = por %p42, %p43
    %s46 = sadd.s32 %s45, 1
    %p49 = scmp.eq.s32.totalorder %s11, 1
    %p50 = scmp.ne.s32.totalorder %s45, %s47
    %p51 = scmp.eq.s32.totalorder %s11, 0
    %p52 = por %p50, %p51
    %p53 = scmp.ne.s32.totalorder %s45, %s47
    %p54 = scmp.eq.s32.totalorder %s16, 1
    %p55 = por %p53, %p54
    %p56 = scmp.ne.s32.totalorder %s47, %s48
    %p57 = scmp.eq.s32.totalorder %s16, 0
    %p58 = por %p56, %p57
    %p59 = scmp.ne.s32.totalorder %s47, %s48
    %p60 = scmp.eq.s32.totalorder %s17, 1
    %p61 = por %p59, %p60
    %p63 = scmp.ne.s32.totalorder %s48, %s62
    %p64 = scmp.eq.s32.totalorder %s17, 0
    %p65 = por %p63, %p64
    %s67 = sadd.s32 %s66, 1
    %p70 = scmp.eq.s32.totalorder %s11, 1
    %p71 = scmp.ne.s32.totalorder %s66, %s68
    %p72 = scmp.eq.s32.totalorder %s11, 0
    %p73 = por %p71, %p72
    %p74 = scmp.ne.s32.totalorder %s66, %s68
    %p75 = scmp.eq.s32.totalorder %s16, 1
    %p76 = por %p74, %p75
    %p77 = scmp.ne.s32.totalorder %s68, %s69
    %p78 = scmp.eq.s32.totalorder %s16, 0
    %p79 = por %p77, %p78
    %p80 = scmp.ne.s32.totalorder %s68, %s69
    %p81 = scmp.eq.s32.totalorder %s17, 1
    %p82 = por %p80, %p81
    %p84 = scmp.ne.s32.totalorder %s69, %s83
    %p85 = scmp.eq.s32.totalorder %s17, 0
    %p86 = por %p84, %p85
    %s88 = sadd.s32 %s87, 1
    %p91 = scmp.eq.s32.totalorder %s11, 1
    %p92 = scmp.ne.s32.totalorder %s87, %s89
    %p93 = scmp.eq.s32.totalorder %s11, 0
    %p94 = por %p92, %p93
    %p95 = scmp.ne.s32.totalorder %s87, %s89
    %p96 = scmp.eq.s32.totalorder %s16, 1
    %p97 = por %p95, %p96
    %p98 = scmp.ne.s32.totalorder %s89, %s90
    %p99 = scmp.eq.s32.totalorder %s16, 0
    %p100 = por %p98, %p99
    %p101 = scmp.ne.s32.totalorder %s89, %s90
    %p102 = scmp.eq.s32.totalorder %s17, 1
    %p103 = por %p101, %p102
    %p105 = scmp.ne.s32.totalorder %s90, %s104
    %p106 = scmp.eq.s32.totalorder %s17, 0
    %p107 = por %p105, %p106
    %s109 = sadd.s32 %s108, 1
    %p112 = scmp.eq.s32.totalorder %s11, 1
    %p113 = scmp.ne.s32.totalorder %s108, %s110
    %p114 = scmp.eq.s32.totalorder %s11, 0
    %p115 = por %p113, %p114
    %p116 = scmp.ne.s32.totalorder %s108, %s110
    %p117 = scmp.eq.s32.totalorder %s16, 1
    %p118 = por %p116, %p117
    %p119 = scmp.ne.s32.totalorder %s110, %s111
    %p120 = scmp.eq.s32.totalorder %s16, 0
    %p121 = por %p119, %p120
    %p122 = scmp.ne.s32.totalorder %s110, %s111
    %p123 = scmp.eq.s32.totalorder %s17, 1
    %p124 = por %p122, %p123
    %p126 = scmp.ne.s32.totalorder %s111, %s125
    %p127 = scmp.eq.s32.totalorder %s17, 0
    %p128 = por %p126, %p127
    %s129 = ssub.s32 %s11, %s18
    %p130 = scmp.eq.s32.totalorder %s129, 0
    %s132 = sadd.s32 %s131, 1
    %s133 = scalar_select %p130, %s131, %s132
    %p136 = pneg %p130
    %p137 = scmp.eq.s32.totalorder %s11, 1
    %p138 = por %p136, %p137
    %p139 = scmp.ne.s32.totalorder %s131, %s134
    %p140 = scmp.eq.s32.totalorder %s11, 0
    %p141 = por %p139, %p140
    %p142 = scmp.ne.s32.totalorder %s131, %s134
    %p143 = scmp.eq.s32.totalorder %s16, 1
    %p144 = por %p142, %p143
    %p145 = scmp.ne.s32.totalorder %s134, %s135
    %p146 = scmp.eq.s32.totalorder %s16, 0
    %p147 = por %p145, %p146
    %p148 = scmp.ne.s32.totalorder %s134, %s135
    %p149 = scmp.eq.s32.totalorder %s17, 1
    %p150 = por %p148, %p149
    %p152 = scmp.ne.s32.totalorder %s135, %s151
    %p153 = scmp.eq.s32.totalorder %s17, 0
    %p154 = por %p152, %p153
    %p155 = scmp.le.s32.totalorder 1, %s11
    %p156 = scmp.lt.s32.totalorder %s11, 3
    %p157 = pnand %p155, %p156
    %p158 = pneg %p157
    // Predicated region
    $region9: #{mirai_chile_forward.2} parent=5 // pred_check
      _
    $region10: #{mirai_chile_forward.2} parent=5 // pred_check_branch
      %160 = sbr.rel (%p157) target = $region12
    $region11: #{mirai_chile_forward.2} parent=5 // pred_region
      %s161 = ssub.s32 %s11, 1
      // Predicated region
      $region13: #{mirai_chile_forward.2} parent=11 // pred_check
        %p162 = pneg %p58
      $region14: #{mirai_chile_forward.2} parent=11 // pred_check_branch
        %164 = sbr.rel (%p162) target = $region16
      $region15: #{mirai_chile_forward.2} parent=11 // pred_region
        _
      $region16: #{mirai_chile_forward.2} parent=11 // pred_fallthru
        _
      // Predicated region
      $region17: #{mirai_chile_forward.2} parent=11 // pred_check
        %p165 = pneg %p79
      $region18: #{mirai_chile_forward.2} parent=11 // pred_check_branch
        %167 = sbr.rel (%p165) target = $region20
      $region19: #{mirai_chile_forward.2} parent=11 // pred_region
        _
      $region20: #{mirai_chile_forward.2} parent=11 // pred_fallthru
        _
      // Predicated region
      $region21: #{mirai_chile_forward.2} parent=11 // pred_check
        %p168 = pneg %p100
      $region22: #{mirai_chile_forward.2} parent=11 // pred_check_branch
        %170 = sbr.rel (%p168) target = $region24
      $region23: #{mirai_chile_forward.2} parent=11 // pred_region
        _
      $region24: #{mirai_chile_forward.2} parent=11 // pred_fallthru
        _
      // Predicated region
      $region25: #{mirai_chile_forward.2} parent=11 // pred_check
        %p171 = pneg %p121
      $region26: #{mirai_chile_forward.2} parent=11 // pred_check_branch
        %173 = sbr.rel (%p171) target = $region28
      $region27: #{mirai_chile_forward.2} parent=11 // pred_region
        _
      $region28: #{mirai_chile_forward.2} parent=11 // pred_fallthru
        _
    $region12: #{mirai_chile_forward.2} parent=5 // pred_fallthru
      _
    %p174 = scmp.lt.s32.totalorder %s11, 2
    // Predicated region
    $region29: #{mirai_chile_forward.2} parent=5 // pred_check
      %p175 = pneg %p174
    $region30: #{mirai_chile_forward.2} parent=5 // pred_check_branch
      %177 = sbr.rel (%p175) target = $region32
    $region31: #{mirai_chile_forward.2} parent=5 // pred_region
      // Predicated region
      $region33: #{mirai_chile_forward.2} parent=31 // pred_check
        %p178 = pneg %p31
      $region34: #{mirai_chile_forward.2} parent=31 // pred_check_branch
        %180 = sbr.rel (%p178) target = $region36
      $region35: #{mirai_chile_forward.2} parent=31 // pred_region
        %p181 = scmp.lt.s32.totalorder %s11, 1
        %s182 = scalar_select %p181, %s11, 1
        %s183 = smul.addr %s182, 32
        %s184 = smul.addr %s183, 4
        %s185 = scalar_lea.vmem %s0, %s184
      $region36: #{mirai_chile_forward.2} parent=31 // pred_fallthru
        _
    $region32: #{mirai_chile_forward.2} parent=5 // pred_fallthru
      _
    %p186 = scmp.le.s32.totalorder 1, %s11
    %p187 = scmp.lt.s32.totalorder %s11, 3
    %p188 = pnand %p186, %p187
    %p189 = pneg %p188
    // Predicated region
    $region37: #{mirai_chile_forward.2} parent=5 // pred_check
      _
    $region38: #{mirai_chile_forward.2} parent=5 // pred_check_branch
      %191 = sbr.rel (%p188) target = $region40
    $region39: #{mirai_chile_forward.2} parent=5 // pred_region
      %s192 = ssub.s32 %s11, 1
      %p193 = scmp.lt.s32.totalorder %s16, 1
      %s194 = scalar_select %p193, %s16, 1
      %s195 = smul.addr %s194, 32
      %s196 = smul.addr %s195, 4
      %s197 = scalar_lea.vmem %s0, %s196
      %p198 = pneg %p37
      %p199 = pneg %p34
      %p200 = pneg %p58
      %p201 = pneg %p55
      %p202 = pneg %p79
      %p203 = pneg %p76
      %p204 = pneg %p100
      %p205 = pneg %p97
      %p206 = pneg %p121
      %p207 = pneg %p118
      %p208 = pneg %p147
      %p209 = pneg %p144
      %p210 = scmp.lt.s32.totalorder %s16, 1
      %s211 = scalar_select %p210, %s16, 1
      %s212 = smul.addr %s211, 4
      %s213 = scalar_lea.vmem %s5, %s212
      %p214 = scmp.lt.s32.totalorder %s16, 1
      %s215 = scalar_select %p214, %s16, 1
      %s216 = smul.addr %s215, 32
      %s217 = smul.addr %s216, 4
      %s218 = scalar_lea.vmem %s0, %s217
      %p219 = scmp.lt.s32.totalorder %s16, 1
      %s220 = scalar_select %p219, %s16, 1
      %s221 = smul.addr %s220, 4
      %s222 = scalar_lea.vmem %s5, %s221
      %v224 = vld [vmem:[%s1] sm:$0xf]
      %v225 = vld [vmem:[%s1 + $0x4] sm:$0xf]
      %v226 = vld [vmem:[%s218] sm:$0xff]
      %v227 = vld [vmem:[%s218 + $0x8] sm:$0xff]
      %v228 = vld [vmem:[%s218 + $0x10] sm:$0xff]
      %v229 = vld [vmem:[%s218 + $0x18] sm:$0xff]
      %v230 = vld [vmem:[%s218 + $0x20] sm:$0xff]
      %v231 = vld [vmem:[%s218 + $0x28] sm:$0xff]
      %v232 = vld [vmem:[%s218 + $0x30] sm:$0xff]
      %v233 = vld [vmem:[%s218 + $0x38] sm:$0xff]
      %v234 = vld [vmem:[%s218 + $0x40] sm:$0xff]
      %v235 = vld [vmem:[%s218 + $0x48] sm:$0xff]
      %v236 = vld [vmem:[%s218 + $0x50] sm:$0xff]
      %v237 = vld [vmem:[%s218 + $0x58] sm:$0xff]
      %v238 = vld [vmem:[%s218 + $0x60] sm:$0x33]
      %v239 = vld [vmem:[%s218 + $0x68] sm:$0x33]
      %v240 = vld [vmem:[%s218 + $0x70] sm:$0x33]
      %v241 = vld [vmem:[%s218 + $0x78] sm:$0x33]
      %v242 = vld [vmem:[%s2] sm:$0xff]
      %v243 = vld [vmem:[%s2 + $0x8] sm:$0xff]
      %245 = vset.pattern.permute.xlu0 0
      %246 = vperm.xlu0 %245, %v242
      %v247 = vpop.permute.xlu0 %246
      %250 = vset.pattern.permute.xlu0 0
      %251 = vperm.xlu0 %250, %v243
      %v252 = vpop.permute.xlu0 %251
      %v256 = vunpack.c.l.b16 %v224
      %v257 = vunpack.c.l.b16 %v225
      %v258 = vpack.c.b16 %v257, %v256
      %v275 = vunpack.c.l.b16 %v226
      %v276 = vunpack.c.h.b16 %v226
      %v277 = vunpack.c.l.b16 %v227
      %v278 = vunpack.c.h.b16 %v227
      %v279 = vunpack.c.l.b16 %v228
      %v280 = vunpack.c.h.b16 %v228
      %v281 = vunpack.c.l.b16 %v229
      %v282 = vunpack.c.h.b16 %v229
      %v283 = vunpack.c.l.b16 %v230
      %v284 = vunpack.c.h.b16 %v230
      %v285 = vunpack.c.l.b16 %v231
      %v286 = vunpack.c.h.b16 %v231
      %v287 = vunpack.c.l.b16 %v232
      %v288 = vunpack.c.h.b16 %v232
      %v289 = vunpack.c.l.b16 %v233
      %v290 = vunpack.c.h.b16 %v233
      %v291 = vunpack.c.l.b16 %v234
      %v292 = vunpack.c.h.b16 %v234
      %v293 = vunpack.c.l.b16 %v235
      %v294 = vunpack.c.h.b16 %v235
      %v295 = vunpack.c.l.b16 %v236
      %v296 = vunpack.c.h.b16 %v236
      %v297 = vunpack.c.l.b16 %v237
      %v298 = vunpack.c.h.b16 %v237
      %v299 = vunpack.c.l.b16 %v238
      %v300 = vunpack.c.h.b16 %v238
      %v301 = vunpack.c.l.b16 %v239
      %v302 = vunpack.c.h.b16 %v239
      %v303 = vunpack.c.l.b16 %v240
      %v304 = vunpack.c.h.b16 %v240
      %v305 = vunpack.c.l.b16 %v241
      %v306 = vunpack.c.h.b16 %v241
      %v307 = vpack.c.b16 %v283, %v275
      %v308 = vpack.c.b16 %v284, %v276
      %v309 = vpack.c.b16 %v285, %v277
      %v310 = vpack.c.b16 %v286, %v278
      %v311 = vpack.c.b16 %v287, %v279
      %v312 = vpack.c.b16 %v288, %v280
      %v313 = vpack.c.b16 %v289, %v281
      %v314 = vpack.c.b16 %v290, %v282
      %v315 = vpack.c.b16 %v299, %v291
      %v316 = vpack.c.b16 %v300, %v292
      %v317 = vpack.c.b16 %v301, %v293
      %v318 = vpack.c.b16 %v302, %v294
      %v319 = vpack.c.b16 %v303, %v295
      %v320 = vpack.c.b16 %v304, %v296
      %v321 = vpack.c.b16 %v305, %v297
      %v322 = vpack.c.b16 %v306, %v298
      %vm331 = vcmask 220160
      %v333 = vsel %vm331, %v258, 0
      %vm335 = vcmask 1044480
      %vm336 = vcmask 1045504
      %v337 = vsel %vm335, 4294967295, 65535
      %v338 = vsel %vm336, %v337, 0
      %v340 = vand.u32 %v315, %v338
      %v343 = vand.u32 %v316, %v338
      %v346 = vand.u32 %v317, %v338
      %v349 = vand.u32 %v318, %v338
      %v352 = vand.u32 %v319, %v338
      %v355 = vand.u32 %v320, %v338
      %v358 = vand.u32 %v321, %v338
      %v361 = vand.u32 %v322, %v338
      %363 = vmatpush.bf16.msra.mxu0 0
      %364 = vmatpush.bf16.msra.mxu0 0
      %365 = vmatpush.bf16.msra.mxu0 0
      %366 = vmatpush.bf16.msra.mxu0 0
      %367 = vmatpush.bf16.msra.mxu0 0
      %368 = vmatpush.bf16.msra.mxu0 0
      %369 = vmatpush.bf16.msra.mxu0 %v340
      %370 = vmatpush.bf16.msra.mxu0 %v307
      %371 = vmatmul.bf16.gmra.mxu0 %v333
      %v372 = vpop.f32.mrf.mxu0
      %v373 = vadd.f32 %v247, %v372
      %v374 = vpop.f32.mrf.mxu0
      %v375 = vadd.f32 %v252, %v374
      %376 = vdwg.mxu0
      %377 = vmatpush.bf16.msra.mxu0 0
      %378 = vmatpush.bf16.msra.mxu0 0
      %379 = vmatpush.bf16.msra.mxu0 0
      %380 = vmatpush.bf16.msra.mxu0 0
      %381 = vmatpush.bf16.msra.mxu0 0
      %382 = vmatpush.bf16.msra.mxu0 0
      %383 = vmatpush.bf16.msra.mxu0 %v343
      %384 = vmatpush.bf16.msra.mxu0 %v308
      %385 = vmatmul.bf16.gmra.mxu0 %v333
      %v386 = vpop.f32.mrf.mxu0
      %v387 = vadd.f32 %v247, %v386
      %v388 = vpop.f32.mrf.mxu0
      %v389 = vadd.f32 %v252, %v388
      %390 = vdwg.mxu0
      %391 = vmatpush.bf16.msra.mxu0 0
      %392 = vmatpush.bf16.msra.mxu0 0
      %393 = vmatpush.bf16.msra.mxu0 0
      %394 = vmatpush.bf16.msra.mxu0 0
      %395 = vmatpush.bf16.msra.mxu0 0
      %396 = vmatpush.bf16.msra.mxu0 0
      %397 = vmatpush.bf16.msra.mxu0 %v346
      %398 = vmatpush.bf16.msra.mxu0 %v309
      %399 = vmatmul.bf16.gmra.mxu0 %v333
      %v400 = vpop.f32.mrf.mxu0
      %v401 = vadd.f32 %v247, %v400
      %v402 = vpop.f32.mrf.mxu0
      %v403 = vadd.f32 %v252, %v402
      %404 = vdwg.mxu0
      %405 = vmatpush.bf16.msra.mxu0 0
      %406 = vmatpush.bf16.msra.mxu0 0
      %407 = vmatpush.bf16.msra.mxu0 0
      %408 = vmatpush.bf16.msra.mxu0 0
      %409 = vmatpush.bf16.msra.mxu0 0
      %410 = vmatpush.bf16.msra.mxu0 0
      %411 = vmatpush.bf16.msra.mxu0 %v349
      %412 = vmatpush.bf16.msra.mxu0 %v310
      %413 = vmatmul.bf16.gmra.mxu0 %v333
      %v414 = vpop.f32.mrf.mxu0
      %v415 = vadd.f32 %v247, %v414
      %v416 = vpop.f32.mrf.mxu0
      %v417 = vadd.f32 %v252, %v416
      %418 = vdwg.mxu0
      %419 = vmatpush.bf16.msra.mxu0 0
      %420 = vmatpush.bf16.msra.mxu0 0
      %421 = vmatpush.bf16.msra.mxu0 0
      %422 = vmatpush.bf16.msra.mxu0 0
      %423 = vmatpush.bf16.msra.mxu0 0
      %424 = vmatpush.bf16.msra.mxu0 0
      %425 = vmatpush.bf16.msra.mxu0 %v352
      %426 = vmatpush.bf16.msra.mxu0 %v311
      %427 = vmatmul.bf16.gmra.mxu0 %v333
      %v428 = vpop.f32.mrf.mxu0
      %v429 = vadd.f32 %v247, %v428
      %v430 = vpop.f32.mrf.mxu0
      %v431 = vadd.f32 %v252, %v430
      %432 = vdwg.mxu0
      %433 = vmatpush.bf16.msra.mxu0 0
      %434 = vmatpush.bf16.msra.mxu0 0
      %435 = vmatpush.bf16.msra.mxu0 0
      %436 = vmatpush.bf16.msra.mxu0 0
      %437 = vmatpush.bf16.msra.mxu0 0
      %438 = vmatpush.bf16.msra.mxu0 0
      %439 = vmatpush.bf16.msra.mxu0 %v355
      %440 = vmatpush.bf16.msra.mxu0 %v312
      %441 = vmatmul.bf16.gmra.mxu0 %v333
      %v442 = vpop.f32.mrf.mxu0
      %v443 = vadd.f32 %v247, %v442
      %v444 = vpop.f32.mrf.mxu0
      %v445 = vadd.f32 %v252, %v444
      %446 = vdwg.mxu0
      %447 = vmatpush.bf16.msra.mxu0 0
      %448 = vmatpush.bf16.msra.mxu0 0
      %449 = vmatpush.bf16.msra.mxu0 0
      %450 = vmatpush.bf16.msra.mxu0 0
      %451 = vmatpush.bf16.msra.mxu0 0
      %452 = vmatpush.bf16.msra.mxu0 0
      %453 = vmatpush.bf16.msra.mxu0 %v358
      %454 = vmatpush.bf16.msra.mxu0 %v313
      %455 = vmatmul.bf16.gmra.mxu0 %v333
      %v456 = vpop.f32.mrf.mxu0
      %v457 = vadd.f32 %v247, %v456
      %v458 = vpop.f32.mrf.mxu0
      %v459 = vadd.f32 %v252, %v458
      %460 = vdwg.mxu0
      %461 = vmatpush.bf16.msra.mxu0 0
      %462 = vmatpush.bf16.msra.mxu0 0
      %463 = vmatpush.bf16.msra.mxu0 0
      %464 = vmatpush.bf16.msra.mxu0 0
      %465 = vmatpush.bf16.msra.mxu0 0
      %466 = vmatpush.bf16.msra.mxu0 0
      %467 = vmatpush.bf16.msra.mxu0 %v361
      %468 = vmatpush.bf16.msra.mxu0 %v314
      %469 = vmatmul.bf16.gmra.mxu0 %v333
      %v470 = vpop.f32.mrf.mxu0
      %v471 = vadd.f32 %v247, %v470
      %v472 = vpop.f32.mrf.mxu0
      %v473 = vadd.f32 %v252, %v472
      %474 = vdwg.mxu0
      %v475 = vmax.f32 %v373, 0.0
      %v476 = vmax.f32 %v387, 0.0
      %v477 = vmax.f32 %v401, 0.0
      %v478 = vmax.f32 %v415, 0.0
      %v479 = vmax.f32 %v429, 0.0
      %v480 = vmax.f32 %v443, 0.0
      %v481 = vmax.f32 %v457, 0.0
      %v482 = vmax.f32 %v471, 0.0
      %v483 = vmax.f32 %v375, 0.0
      %v484 = vmax.f32 %v389, 0.0
      %v485 = vmax.f32 %v403, 0.0
      %v486 = vmax.f32 %v417, 0.0
      %v487 = vmax.f32 %v431, 0.0
      %v488 = vmax.f32 %v445, 0.0
      %v489 = vmax.f32 %v459, 0.0
      %v490 = vmax.f32 %v473, 0.0
      %v507 = vrot.slane %v476, 4
      %v508 = vrot.slane %v484, 4
      %v509 = vrot.slane %v478, 4
      %v510 = vrot.slane %v486, 4
      %v511 = vrot.slane %v480, 4
      %v512 = vrot.slane %v488, 4
      %v513 = vrot.slane %v482, 4
      %v514 = vrot.slane %v490, 4
      %vm515 = vcmask 1043456
      %v516 = vsel %vm515, %v475, %v507
      %v517 = vsel %vm515, %v507, %v475
      %v518 = vrot.slane %v517, 4
      %v519 = vsel %vm515, %v483, %v508
      %v520 = vsel %vm515, %v508, %v483
      %v521 = vrot.slane %v520, 4
      %v522 = vsel %vm515, %v477, %v509
      %v523 = vsel %vm515, %v509, %v477
      %v524 = vrot.slane %v523, 4
      %v525 = vsel %vm515, %v485, %v510
      %v526 = vsel %vm515, %v510, %v485
      %v527 = vrot.slane %v526, 4
      %v528 = vsel %vm515, %v479, %v511
      %v529 = vsel %vm515, %v511, %v479
      %v530 = vrot.slane %v529, 4
      %v531 = vsel %vm515, %v487, %v512
      %v532 = vsel %vm515, %v512, %v487
      %v533 = vrot.slane %v532, 4
      %v534 = vsel %vm515, %v481, %v513
      %v535 = vsel %vm515, %v513, %v481
      %v536 = vrot.slane %v535, 4
      %v537 = vsel %vm515, %v489, %v514
      %v538 = vsel %vm515, %v514, %v489
      %v539 = vrot.slane %v538, 4
      %v556 = vrot.slane %v528, 4
      %vm557 = vcmask 1047556
      %v558 = vsel %vm557, %v556, %v516
      %v559 = vrot.slane %v516, 4
      %v560 = vsel %vm557, %v528, %v559
      %v562 = vunpack.c.l.s4 1983009808
      %v563 = vunpack.c.0.s8 %v562
      %v564 = vperm.slane %v558, %v563
      %v566 = vunpack.c.l.s4 1983009808
      %v567 = vunpack.c.0.s8 %v566
      %v568 = vperm.slane %v560, %v567
      %v569 = vrot.slane %v534, 4
      %v570 = vsel %vm557, %v569, %v522
      %v571 = vrot.slane %v522, 4
      %v572 = vsel %vm557, %v534, %v571
      %v574 = vunpack.c.l.s4 1983009808
      %v575 = vunpack.c.0.s8 %v574
      %v576 = vperm.slane %v570, %v575
      %v578 = vunpack.c.l.s4 1983009808
      %v579 = vunpack.c.0.s8 %v578
      %v580 = vperm.slane %v572, %v579
      %v581 = vrot.slane %v576, 4
      %v582 = vsel %vm557, %v581, %v564
      %v583 = vrot.slane %v564, 4
      %v584 = vsel %vm557, %v576, %v583
      %v586 = vunpack.c.l.s4 1934713408
      %v587 = vunpack.c.0.s8 %v586
      %v588 = vperm.slane %v582, %v587
      %v590 = vunpack.c.l.s4 1934713408
      %v591 = vunpack.c.0.s8 %v590
      %v592 = vperm.slane %v584, %v591
      %v593 = vrot.slane %v580, 4
      %v594 = vsel %vm557, %v593, %v568
      %v595 = vrot.slane %v568, 4
      %v596 = vsel %vm557, %v580, %v595
      %v598 = vunpack.c.l.s4 1934713408
      %v599 = vunpack.c.0.s8 %v598
      %v600 = vperm.slane %v594, %v599
      %v602 = vunpack.c.l.s4 1934713408
      %v603 = vunpack.c.0.s8 %v602
      %v604 = vperm.slane %v596, %v603
      %v605 = vrot.slane %v600, 4
      %v606 = vsel %vm557, %v605, %v588
      %v607 = vrot.slane %v588, 4
      %v608 = vsel %vm557, %v600, %v607
      %v609 = vrot.slane %v604, 4
      %v610 = vsel %vm557, %v609, %v592
      %v611 = vrot.slane %v592, 4
      %v612 = vsel %vm557, %v604, %v611
      %v613 = vrot.slane %v530, 4
      %v614 = vsel %vm557, %v613, %v518
      %v615 = vrot.slane %v518, 4
      %v616 = vsel %vm557, %v530, %v615
      %v618 = vunpack.c.l.s4 1983009808
      %v619 = vunpack.c.0.s8 %v618
      %v620 = vperm.slane %v614, %v619
      %v622 = vunpack.c.l.s4 1983009808
      %v623 = vunpack.c.0.s8 %v622
      %v624 = vperm.slane %v616, %v623
      %v625 = vrot.slane %v536, 4
      %v626 = vsel %vm557, %v625, %v524
      %v627 = vrot.slane %v524, 4
      %v628 = vsel %vm557, %v536, %v627
      %v630 = vunpack.c.l.s4 1983009808
      %v631 = vunpack.c.0.s8 %v630
      %v632 = vperm.slane %v626, %v631
      %v634 = vunpack.c.l.s4 1983009808
      %v635 = vunpack.c.0.s8 %v634
      %v636 = vperm.slane %v628, %v635
      %v637 = vrot.slane %v632, 4
      %v638 = vsel %vm557, %v637, %v620
      %v639 = vrot.slane %v620, 4
      %v640 = vsel %vm557, %v632, %v639
      %v642 = vunpack.c.l.s4 1934713408
      %v643 = vunpack.c.0.s8 %v642
      %v644 = vperm.slane %v638, %v643
      %v646 = vunpack.c.l.s4 1934713408
      %v647 = vunpack.c.0.s8 %v646
      %v648 = vperm.slane %v640, %v647
      %v649 = vrot.slane %v636, 4
      %v650 = vsel %vm557, %v649, %v624
      %v651 = vrot.slane %v624, 4
      %v652 = vsel %vm557, %v636, %v651
      %v654 = vunpack.c.l.s4 1934713408
      %v655 = vunpack.c.0.s8 %v654
      %v656 = vperm.slane %v650, %v655
      %v658 = vunpack.c.l.s4 1934713408
      %v659 = vunpack.c.0.s8 %v658
      %v660 = vperm.slane %v652, %v659
      %v661 = vrot.slane %v656, 4
      %v662 = vsel %vm557, %v661, %v644
      %v663 = vrot.slane %v644, 4
      %v664 = vsel %vm557, %v656, %v663
      %v665 = vrot.slane %v660, 4
      %v666 = vsel %vm557, %v665, %v648
      %v667 = vrot.slane %v648, 4
      %v668 = vsel %vm557, %v660, %v667
      %v669 = vrot.slane %v531, 4
      %v670 = vsel %vm557, %v669, %v519
      %v671 = vrot.slane %v519, 4
      %v672 = vsel %vm557, %v531, %v671
      %v674 = vunpack.c.l.s4 1983009808
      %v675 = vunpack.c.0.s8 %v674
      %v676 = vperm.slane %v670, %v675
      %v678 = vunpack.c.l.s4 1983009808
      %v679 = vunpack.c.0.s8 %v678
      %v680 = vperm.slane %v672, %v679
      %v681 = vrot.slane %v537, 4
      %v682 = vsel %vm557, %v681, %v525
      %v683 = vrot.slane %v525, 4
      %v684 = vsel %vm557, %v537, %v683
      %v686 = vunpack.c.l.s4 1983009808
      %v687 = vunpack.c.0.s8 %v686
      %v688 = vperm.slane %v682, %v687
      %v690 = vunpack.c.l.s4 1983009808
      %v691 = vunpack.c.0.s8 %v690
      %v692 = vperm.slane %v684, %v691
      %v693 = vrot.slane %v688, 4
      %v694 = vsel %vm557, %v693, %v676
      %v695 = vrot.slane %v676, 4
      %v696 = vsel %vm557, %v688, %v695
      %v698 = vunpack.c.l.s4 1934713408
      %v699 = vunpack.c.0.s8 %v698
      %v700 = vperm.slane %v694, %v699
      %v702 = vunpack.c.l.s4 1934713408
      %v703 = vunpack.c.0.s8 %v702
      %v704 = vperm.slane %v696, %v703
      %v705 = vrot.slane %v692, 4
      %v706 = vsel %vm557, %v705, %v680
      %v707 = vrot.slane %v680, 4
      %v708 = vsel %vm557, %v692, %v707
      %v710 = vunpack.c.l.s4 1934713408
      %v711 = vunpack.c.0.s8 %v710
      %v712 = vperm.slane %v706, %v711
      %v714 = vunpack.c.l.s4 1934713408
      %v715 = vunpack.c.0.s8 %v714
      %v716 = vperm.slane %v708, %v715
      %v717 = vrot.slane %v712, 4
      %v718 = vsel %vm557, %v717, %v700
      %v719 = vrot.slane %v700, 4
      %v720 = vsel %vm557, %v712, %v719
      %v721 = vrot.slane %v716, 4
      %v722 = vsel %vm557, %v721, %v704
      %v723 = vrot.slane %v704, 4
      %v724 = vsel %vm557, %v716, %v723
      %v725 = vrot.slane %v533, 4
      %v726 = vsel %vm557, %v725, %v521
      %v727 = vrot.slane %v521, 4
      %v728 = vsel %vm557, %v533, %v727
      %v730 = vunpack.c.l.s4 1983009808
      %v731 = vunpack.c.0.s8 %v730
      %v732 = vperm.slane %v726, %v731
      %v734 = vunpack.c.l.s4 1983009808
      %v735 = vunpack.c.0.s8 %v734
      %v736 = vperm.slane %v728, %v735
      %v737 = vrot.slane %v539, 4
      %v738 = vsel %vm557, %v737, %v527
      %v739 = vrot.slane %v527, 4
      %v740 = vsel %vm557, %v539, %v739
      %v742 = vunpack.c.l.s4 1983009808
      %v743 = vunpack.c.0.s8 %v742
      %v744 = vperm.slane %v738, %v743
      %v746 = vunpack.c.l.s4 1983009808
      %v747 = vunpack.c.0.s8 %v746
      %v748 = vperm.slane %v740, %v747
      %v749 = vrot.slane %v744, 4
      %v750 = vsel %vm557, %v749, %v732
      %v751 = vrot.slane %v732, 4
      %v752 = vsel %vm557, %v744, %v751
      %v754 = vunpack.c.l.s4 1934713408
      %v755 = vunpack.c.0.s8 %v754
      %v756 = vperm.slane %v750, %v755
      %v758 = vunpack.c.l.s4 1934713408
      %v759 = vunpack.c.0.s8 %v758
      %v760 = vperm.slane %v752, %v759
      %v761 = vrot.slane %v748, 4
      %v762 = vsel %vm557, %v761, %v736
      %v763 = vrot.slane %v736, 4
      %v764 = vsel %vm557, %v748, %v763
      %v766 = vunpack.c.l.s4 1934713408
      %v767 = vunpack.c.0.s8 %v766
      %v768 = vperm.slane %v762, %v767
      %v770 = vunpack.c.l.s4 1934713408
      %v771 = vunpack.c.0.s8 %v770
      %v772 = vperm.slane %v764, %v771
      %v773 = vrot.slane %v768, 4
      %v774 = vsel %vm557, %v773, %v756
      %v775 = vrot.slane %v756, 4
      %v776 = vsel %vm557, %v768, %v775
      %v777 = vrot.slane %v772, 4
      %v778 = vsel %vm557, %v777, %v760
      %v779 = vrot.slane %v760, 4
      %v780 = vsel %vm557, %v772, %v779
      %797 = vst [vmem:[#allocation1] ss:$2 sm:$0xff] %v606
      %v798 = vld.sshfl [vmem:[#allocation1] sm:$0xff pattern:$0x75316420]
      %v799 = vld.sshfl [vmem:[#allocation1 + $0x8] sm:$0xff pattern:$0x75316420]
      %s800 = scalar_lea.vmem [#allocation1], 16
      %801 = vst [vmem:[%s800] ss:$2 sm:$0xff] %v608
      %v802 = vld.sshfl [vmem:[#allocation1 + $0x10] sm:$0xff pattern:$0x75316420]
      %v803 = vld.sshfl [vmem:[#allocation1 + $0x18] sm:$0xff pattern:$0x75316420]
      %s804 = scalar_lea.vmem [#allocation1], 32
      %805 = vst [vmem:[%s804] ss:$2 sm:$0xff] %v610
      %v806 = vld.sshfl [vmem:[#allocation1 + $0x20] sm:$0xff pattern:$0x75316420]
      %v807 = vld.sshfl [vmem:[#allocation1 + $0x28] sm:$0xff pattern:$0x75316420]
      %s808 = scalar_lea.vmem [#allocation1], 48
      %809 = vst [vmem:[%s808] ss:$2 sm:$0xff] %v612
      %v810 = vld.sshfl [vmem:[#allocation1 + $0x30] sm:$0xff pattern:$0x75316420]
      %v811 = vld.sshfl [vmem:[#allocation1 + $0x38] sm:$0xff pattern:$0x75316420]
      %812 = vst [vmem:[#allocation1] ss:$2 sm:$0xff] %v662
      %v813 = vld.sshfl [vmem:[#allocation1] sm:$0xff pattern:$0x75316420]
      %v814 = vld.sshfl [vmem:[#allocation1 + $0x8] sm:$0xff pattern:$0x75316420]
      %815 = vst [vmem:[%s800] ss:$2 sm:$0xff] %v664
      %v816 = vld.sshfl [vmem:[#allocation1 + $0x10] sm:$0xff pattern:$0x75316420]
      %v817 = vld.sshfl [vmem:[#allocation1 + $0x18] sm:$0xff pattern:$0x75316420]
      %818 = vst [vmem:[%s804] ss:$2 sm:$0xff] %v666
      %v819 = vld.sshfl [vmem:[#allocation1 + $0x20] sm:$0xff pattern:$0x75316420]
      %v820 = vld.sshfl [vmem:[#allocation1 + $0x28] sm:$0xff pattern:$0x75316420]
      %821 = vst [vmem:[%s808] ss:$2 sm:$0xff] %v668
      %v822 = vld.sshfl [vmem:[#allocation1 + $0x30] sm:$0xff pattern:$0x75316420]
      %v823 = vld.sshfl [vmem:[#allocation1 + $0x38] sm:$0xff pattern:$0x75316420]
      %824 = vst [vmem:[#allocation1] ss:$2 sm:$0xff] %v718
      %v825 = vld.sshfl [vmem:[#allocation1] sm:$0xff pattern:$0x75316420]
      %v826 = vld.sshfl [vmem:[#allocation1 + $0x8] sm:$0xff pattern:$0x75316420]
      %827 = vst [vmem:[%s800] ss:$2 sm:$0xff] %v720
      %v828 = vld.sshfl [vmem:[#allocation1 + $0x10] sm:$0xff pattern:$0x75316420]
      %v829 = vld.sshfl [vmem:[#allocation1 + $0x18] sm:$0xff pattern:$0x75316420]
      %830 = vst [vmem:[%s804] ss:$2 sm:$0xff] %v722
      %v831 = vld.sshfl [vmem:[#allocation1 + $0x20] sm:$0xff pattern:$0x75316420]
      %v832 = vld.sshfl [vmem:[#allocation1 + $0x28] sm:$0xff pattern:$0x75316420]
      %833 = vst [vmem:[%s808] ss:$2 sm:$0xff] %v724
      %v834 = vld.sshfl [vmem:[#allocation1 + $0x30] sm:$0xff pattern:$0x75316420]
      %v835 = vld.sshfl [vmem:[#allocation1 + $0x38] sm:$0xff pattern:$0x75316420]
      %836 = vst [vmem:[#allocation1] ss:$2 sm:$0xff] %v774
      %v837 = vld.sshfl [vmem:[#allocation1] sm:$0xff pattern:$0x75316420]
      %v838 = vld.sshfl [vmem:[#allocation1 + $0x8] sm:$0xff pattern:$0x75316420]
      %839 = vst [vmem:[%s800] ss:$2 sm:$0xff] %v776
      %v840 = vld.sshfl [vmem:[#allocation1 + $0x10] sm:$0xff pattern:$0x75316420]
      %v841 = vld.sshfl [vmem:[#allocation1 + $0x18] sm:$0xff pattern:$0x75316420]
      %842 = vst [vmem:[%s804] ss:$2 sm:$0xff] %v778
      %v843 = vld.sshfl [vmem:[#allocation1 + $0x20] sm:$0xff pattern:$0x75316420]
      %v844 = vld.sshfl [vmem:[#allocation1 + $0x28] sm:$0xff pattern:$0x75316420]
      %845 = vst [vmem:[%s808] ss:$2 sm:$0xff] %v780
      %v846 = vld.sshfl [vmem:[#allocation1 + $0x30] sm:$0xff pattern:$0x75316420]
      %v847 = vld.sshfl [vmem:[#allocation1 + $0x38] sm:$0xff pattern:$0x75316420]
      %v880 = vsel %vm515, %v798, 0.0
      %v881 = vsel %vm515, %v799, 0.0
      %v882 = vadd.f32 %v880, %v881
      %883 = vadd.xlane.f32.xlu0 %v882
      %v884 = vpop.xlane.xlu0 %883
      %v885 = vsel %vm515, %v802, 0.0
      %v886 = vsel %vm515, %v803, 0.0
      %v887 = vadd.f32 %v885, %v886
      %888 = vadd.xlane.f32.xlu0 %v887
      %v889 = vpop.xlane.xlu0 %888
      %v890 = vsel %vm515, %v806, 0.0
      %v891 = vsel %vm515, %v807, 0.0
      %v892 = vadd.f32 %v890, %v891
      %893 = vadd.xlane.f32.xlu0 %v892
      %v894 = vpop.xlane.xlu0 %893
      %v895 = vsel %vm515, %v810, 0.0
      %v896 = vsel %vm515, %v811, 0.0
      %v897 = vadd.f32 %v895, %v896
      %898 = vadd.xlane.f32.xlu0 %v897
      %v899 = vpop.xlane.xlu0 %898
      %v900 = vsel %vm515, %v813, 0.0
      %v901 = vsel %vm515, %v814, 0.0
      %v902 = vadd.f32 %v900, %v901
      %903 = vadd.xlane.f32.xlu0 %v902
      %v904 = vpop.xlane.xlu0 %903
      %v905 = vsel %vm515, %v816, 0.0
      %v906 = vsel %vm515, %v817, 0.0
      %v907 = vadd.f32 %v905, %v906
      %908 = vadd.xlane.f32.xlu0 %v907
      %v909 = vpop.xlane.xlu0 %908
      %v910 = vsel %vm515, %v819, 0.0
      %v911 = vsel %vm515, %v820, 0.0
      %v912 = vadd.f32 %v910, %v911
      %913 = vadd.xlane.f32.xlu0 %v912
      %v914 = vpop.xlane.xlu0 %913
      %v915 = vsel %vm515, %v822, 0.0
      %v916 = vsel %vm515, %v823, 0.0
      %v917 = vadd.f32 %v915, %v916
      %918 = vadd.xlane.f32.xlu0 %v917
      %v919 = vpop.xlane.xlu0 %918
      %v920 = vsel %vm515, %v825, 0.0
      %v921 = vsel %vm515, %v826, 0.0
      %v922 = vadd.f32 %v920, %v921
      %923 = vadd.xlane.f32.xlu0 %v922
      %v924 = vpop.xlane.xlu0 %923
      %v925 = vsel %vm515, %v828, 0.0
      %v926 = vsel %vm515, %v829, 0.0
      %v927 = vadd.f32 %v925, %v926
      %928 = vadd.xlane.f32.xlu0 %v927
      %v929 = vpop.xlane.xlu0 %928
      %v930 = vsel %vm515, %v831, 0.0
      %v931 = vsel %vm515, %v832, 0.0
      %v932 = vadd.f32 %v930, %v931
      %933 = vadd.xlane.f32.xlu0 %v932
      %v934 = vpop.xlane.xlu0 %933
      %v935 = vsel %vm515, %v834, 0.0
      %v936 = vsel %vm515, %v835, 0.0
      %v937 = vadd.f32 %v935, %v936
      %938 = vadd.xlane.f32.xlu0 %v937
      %v939 = vpop.xlane.xlu0 %938
      %v940 = vsel %vm515, %v837, 0.0
      %v941 = vsel %vm515, %v838, 0.0
      %v942 = vadd.f32 %v940, %v941
      %943 = vadd.xlane.f32.xlu0 %v942
      %v944 = vpop.xlane.xlu0 %943
      %v945 = vsel %vm515, %v840, 0.0
      %v946 = vsel %vm515, %v841, 0.0
      %v947 = vadd.f32 %v945, %v946
      %948 = vadd.xlane.f32.xlu0 %v947
      %v949 = vpop.xlane.xlu0 %948
      %v950 = vsel %vm515, %v843, 0.0
      %v951 = vsel %vm515, %v844, 0.0
      %v952 = vadd.f32 %v950, %v951
      %953 = vadd.xlane.f32.xlu0 %v952
      %v954 = vpop.xlane.xlu0 %953
      %v955 = vsel %vm515, %v846, 0.0
      %v956 = vsel %vm515, %v847, 0.0
      %v957 = vadd.f32 %v955, %v956
      %958 = vadd.xlane.f32.xlu0 %v957
      %v959 = vpop.xlane.xlu0 %958
      %v960 = vmul.f32 %v884, 0.00390625
      %v961 = vmul.f32 %v889, 0.00390625
      %v962 = vmul.f32 %v894, 0.00390625
      %v963 = vmul.f32 %v899, 0.00390625
      %v964 = vmul.f32 %v904, 0.00390625
      %v965 = vmul.f32 %v909, 0.00390625
      %v966 = vmul.f32 %v914, 0.00390625
      %v967 = vmul.f32 %v919, 0.00390625
      %v968 = vmul.f32 %v924, 0.00390625
      %v969 = vmul.f32 %v929, 0.00390625
      %v970 = vmul.f32 %v934, 0.00390625
      %v971 = vmul.f32 %v939, 0.00390625
      %v972 = vmul.f32 %v944, 0.00390625
      %v973 = vmul.f32 %v949, 0.00390625
      %v974 = vmul.f32 %v954, 0.00390625
      %v975 = vmul.f32 %v959, 0.00390625
      %v976 = vpack.c.bf16 %v960, %v960
      %v977 = vpack.c.bf16 %v961, %v961
      %v978 = vpack.c.bf16 %v962, %v962
      %v979 = vpack.c.bf16 %v963, %v963
      %v980 = vpack.c.bf16 %v964, %v964
      %v981 = vpack.c.bf16 %v965, %v965
      %v982 = vpack.c.bf16 %v966, %v966
      %v983 = vpack.c.bf16 %v967, %v967
      %v984 = vpack.c.bf16 %v968, %v968
      %v985 = vpack.c.bf16 %v969, %v969
      %v986 = vpack.c.bf16 %v970, %v970
      %v987 = vpack.c.bf16 %v971, %v971
      %v988 = vpack.c.bf16 %v972, %v972
      %v989 = vpack.c.bf16 %v973, %v973
      %v990 = vpack.c.bf16 %v974, %v974
      %v991 = vpack.c.bf16 %v975, %v975
      %v992 = vld [vmem:[%s3] sm:$0xf]
      %v993 = vld [vmem:[%s3 + $0x4] sm:$0xf]
      %v994 = vld [vmem:[%s4] sm:$0x1]
      %v996 = vperm.slane %v994, 0
      %v1014 = vunpack.c.l.b16 %v976
      %v1015 = vunpack.c.l.b16 %v977
      %v1016 = vunpack.c.l.b16 %v978
      %v1017 = vunpack.c.l.b16 %v979
      %v1018 = vunpack.c.l.b16 %v980
      %v1019 = vunpack.c.l.b16 %v981
      %v1020 = vunpack.c.l.b16 %v982
      %v1021 = vunpack.c.l.b16 %v983
      %v1022 = vunpack.c.l.b16 %v984
      %v1023 = vunpack.c.l.b16 %v985
      %v1024 = vunpack.c.l.b16 %v986
      %v1025 = vunpack.c.l.b16 %v987
      %v1026 = vunpack.c.l.b16 %v988
      %v1027 = vunpack.c.l.b16 %v989
      %v1028 = vunpack.c.l.b16 %v990
      %v1029 = vunpack.c.l.b16 %v991
      %v1030 = vlaneseq
      %v1031 = vand.u32 %v1030, 127
      %v1032 = vperm.slane %v1014, %v1031
      %v1033 = vperm.slane %v1015, %v1031
      %v1034 = vperm.slane %v1016, %v1031
      %v1035 = vperm.slane %v1017, %v1031
      %v1036 = vperm.slane %v1018, %v1031
      %v1037 = vperm.slane %v1019, %v1031
      %v1038 = vperm.slane %v1020, %v1031
      %v1039 = vperm.slane %v1021, %v1031
      %v1040 = vperm.slane %v1022, %v1031
      %v1041 = vperm.slane %v1023, %v1031
      %v1042 = vperm.slane %v1024, %v1031
      %v1043 = vperm.slane %v1025, %v1031
      %v1044 = vperm.slane %v1026, %v1031
      %v1045 = vperm.slane %v1027, %v1031
      %v1046 = vperm.slane %v1028, %v1031
      %v1047 = vperm.slane %v1029, %v1031
      %vm1048 = vcmask 1041409
      %v1049 = vsel %vm1048, %v1033, %v1032
      %vm1050 = vcmask 1042434
      %v1051 = vsel %vm1050, %v1034, %v1049
      %vm1052 = vcmask 1043459
      %v1053 = vsel %vm1052, %v1035, %v1051
      %vm1054 = vcmask 1044484
      %v1055 = vsel %vm1054, %v1036, %v1053
      %vm1056 = vcmask 1045509
      %v1057 = vsel %vm1056, %v1037, %v1055
      %vm1058 = vcmask 1046534
      %v1059 = vsel %vm1058, %v1038, %v1057
      %vm1060 = vcmask 1047559
      %v1061 = vsel %vm1060, %v1039, %v1059
      %v1062 = vsel %vm1048, %v1041, %v1040
      %v1063 = vsel %vm1050, %v1042, %v1062
      %v1064 = vsel %vm1052, %v1043, %v1063
      %v1065 = vsel %vm1054, %v1044, %v1064
      %v1066 = vsel %vm1056, %v1045, %v1065
      %v1067 = vsel %vm1058, %v1046, %v1066
      %v1068 = vsel %vm1060, %v1047, %v1067
      %v1069 = vpack.c.b16 %v1068, %v1061
      %1071 = vxpose.xlu0.c.b16.start [1/8] %v1069, 128
      %1072 = vxpose.xlu0.c.b16.cont [2/8] 0, 128
      %1073 = vxpose.xlu0.c.b16.cont [3/8] 0, 128
      %1074 = vxpose.xlu0.c.b16.cont [4/8] 0, 128
      %1075 = vxpose.xlu0.c.b16.cont [5/8] 0, 128
      %1076 = vxpose.xlu0.c.b16.cont [6/8] 0, 128
      %1077 = vxpose.xlu0.c.b16.cont [7/8] 0, 128
      %1078 = vxpose.xlu0.c.b16.end [8/8] 0, 128
      %v1079 = vpop.trf.xlu0
      %v1080 = vpop.trf.xlu0
      %v1081 = vpop.trf.xlu0
      %v1082 = vpop.trf.xlu0
      %v1083 = vpop.trf.xlu0
      %v1084 = vpop.trf.xlu0
      %v1085 = vpop.trf.xlu0
      %v1086 = vpop.trf.xlu0
      %v1089 = vunpack.c.l.b16 %v992
      %v1090 = vunpack.c.l.b16 %v993
      %v1091 = vpack.c.b16 %v1090, %v1089
      %vm1093 = vcmask 130048
      %v1095 = vsel %vm1093, %v1079, 0
      %1097 = vmatpush.bf16.msra.mxu0 0
      %1098 = vmatpush.bf16.msra.mxu0 0
      %1099 = vmatpush.bf16.msra.mxu0 0
      %1100 = vmatpush.bf16.msra.mxu0 0
      %1101 = vmatpush.bf16.msra.mxu0 0
      %1102 = vmatpush.bf16.msra.mxu0 0
      %1103 = vmatpush.bf16.msra.mxu0 0
      %1104 = vmatpush.bf16.msra.mxu0 %v1091
      %1105 = vmatmul.bf16.gmra.mxu0 %v1095
      %v1106 = vpop.f32.mrf.mxu0
      %v1107 = vadd.f32 %v996, %v1106
      %v1108 = vpop.f32.mrf.mxu0
      %1109 = vdwg.mxu0
      %v1110 = vmax.f32 %v1107, 0.0
      %1111 = vst [vmem:[%s222] sm:$0xf] %v1110
      %p1112 = scmp.lt.s32.totalorder %s16, 1
      %s1113 = scalar_select %p1112, %s16, 1
      %s1114 = smul.addr %s1113, 4
      %s1115 = scalar_lea.vmem %s5, %s1114
      // Predicated region
      $region41: #{mirai_chile_forward.2} parent=39 // pred_check
        %p1116 = pneg %p144
      $region42: #{mirai_chile_forward.2} parent=39 // pred_check_branch
        %1118 = sbr.rel (%p1116) target = $region44
      $region43: #{mirai_chile_forward.2} parent=39 // pred_region
        _
      $region44: #{mirai_chile_forward.2} parent=39 // pred_fallthru
        _
    $region40: #{mirai_chile_forward.2} parent=5 // pred_fallthru
      _
    %p1119 = scmp.le.s32.totalorder 2, %s11
    // Predicated region
    $region45: #{mirai_chile_forward.2} parent=5 // pred_check
      %p1120 = pneg %p1119
    $region46: #{mirai_chile_forward.2} parent=5 // pred_check_branch
      %1122 = sbr.rel (%p1120) target = $region48
    $region47: #{mirai_chile_forward.2} parent=5 // pred_region
      %s1123 = ssub.s32 %s11, 2
      // Predicated region
      $region49: #{mirai_chile_forward.2} parent=47 // pred_check
        %p1124 = pneg %p150
      $region50: #{mirai_chile_forward.2} parent=47 // pred_check_branch
        %1126 = sbr.rel (%p1124) target = $region52
      $region51: #{mirai_chile_forward.2} parent=47 // pred_region
        %p1127 = scmp.lt.s32.totalorder %s17, 1
        %s1128 = scalar_select %p1127, %s17, 1
        %s1129 = smul.addr %s1128, 4
        %s1130 = scalar_lea.vmem %s5, %s1129
      $region52: #{mirai_chile_forward.2} parent=47 // pred_fallthru
        _
    $region48: #{mirai_chile_forward.2} parent=5 // pred_fallthru
      _
  $region6: #{mirai_chile_forward.2} parent=0 // loop_footer
    %s15 = sadd.s32 1, %s11
  $region7: #{mirai_chile_forward.2} parent=0 // loop_footer_branch
    %10 = sbr.rel target = $region3
  $region8: #{mirai_chile_forward.2} parent=0 // loop_exit
    _

// kernel: mirai_chile_forward.3
$region0: #{mirai_chile_forward.3}
  #allocation0 [shape = 'u32[]', space=smem, size = 0x4, offset = 0x4, fixed_abs, tag = 'smem constant byte address 0x4 - core index']
  #allocation1 [shape = 'u32[72,128]{1,0:T(1,128)}', space=vmem, size = 0x9000, scoped, tag = 'internal scratch']
  %s0 = inlined_call_operand.vmem [shape: f32[2,1,4,128], index: 0, kind: input, shape index: {}]
  %s1 = inlined_call_operand.vmem [shape: f32[2,1,4,1], index: 1, kind: input, shape index: {}]
  %s2 = inlined_call_operand.vmem [shape: f32[2,1,4,128], index: 2, kind: input, shape index: {}]
  %s3 = inlined_call_operand.vmem [shape: f32[1,128], index: 3, kind: input, shape index: {}]
  %s4 = inlined_call_operand.vmem [shape: bf16[128,128], index: 4, kind: input, shape index: {}]
  %s5 = inlined_call_operand.vmem [shape: f32[1,128], index: 5, kind: input, shape index: {}]
  %s6 = inlined_call_operand.vmem [shape: bf16[128,384], index: 6, kind: input, shape index: {}]
  %s7 = inlined_call_operand.vmem [shape: bf16[128,128], index: 7, kind: input, shape index: {}]
  %s8 = inlined_call_operand.vmem [shape: bf16[128,256], index: 8, kind: input, shape index: {}]
  %s9 = inlined_call_operand.vmem [shape: f32[1,256], index: 9, kind: input, shape index: {}]
  %s10 = inlined_call_operand.vmem [shape: bf16[256,128], index: 10, kind: input, shape index: {}]
  %s11 = inlined_call_operand.vmem [shape: f32[1,128], index: 11, kind: input, shape index: {}]
  %s12 = inlined_call_operand.vmem [shape: bf16[128,5], index: 12, kind: input, shape index: {}]
  %s13 = inlined_call_operand.vmem [shape: f32[1,5], index: 13, kind: input, shape index: {}]
  %s14 = inlined_call_operand.hbm [shape: f32[2,1,5], index: 14, kind: output, shape index: {0}]
  %s15 = inlined_call_operand.hbm [shape: f32[2,1,128], index: 15, kind: output, shape index: {1}]
  %16 = xla_tuple %s14, %s15
  %s17 = sld [smem:[#allocation0]]
  $region97: #{mirai_chile_forward.3} parent=0
    _
  %s19 = ssub.s32 1, %s17
  %s20 = scalar_select 0, %s19, %s17
  $region1: #{mirai_chile_forward.3} parent=0
    #allocation2 [shape = 'u8[1024]{0}', space=vmem, size = 0x400, scoped, tag = 'output window, operand 0']
    #allocation3 [shape = 's32[2]{0}', space=sflag, size = 0x8, scoped, tag = 'scoped memory for mirai_chile_forward.3']
    #allocation4 [shape = 'u8[1024]{0}', space=vmem, size = 0x400, scoped, tag = 'output window, operand 1']
    #allocation5 [shape = 's32[2]{0}', space=sflag, size = 0x8, scoped, tag = 'scoped memory for mirai_chile_forward.3']
    %21 = vsyncpa [#allocation3], 0
    %s22 = scalar_lea.sflag [#allocation3], 1
    %23 = vsyncpa %s22, 0
    %24 = vsyncpa [#allocation5], 0
    %s25 = scalar_lea.sflag [#allocation5], 1
    %26 = vsyncpa %s25, 0
    loop: start=0, step=1, limit=4
    $region2: #{mirai_chile_forward.3} parent=1 // loop_pre_header
      _
    $region3: #{mirai_chile_forward.3} parent=1 // loop_header
      %s28 = sphi 0, %s32
      %p29 = scmp.ge.s32.totalorder %s28, 4
      %s38 = sphi 0, %s40
      %s41 = sphi 0, %s38
      %s42 = sphi 0, %s41
      %s58 = sphi 0, %s42
      %s64 = sphi 0, %s66
      %s67 = sphi 0, %s64
      %s68 = sphi 0, %s67
      %s84 = sphi 0, %s68
      %s90 = sphi 0, %s92
      %s93 = sphi 0, %s90
      %s94 = sphi 0, %s93
      %s110 = sphi 0, %s94
      %s114 = sphi 0, %s114
      %s116 = sphi 0, %s114
      %s117 = sphi 0, %s116
      %s131 = sphi 0, %s117
      %s135 = sphi 0, %s135
      %s137 = sphi 0, %s135
      %s138 = sphi 0, %s137
      %s152 = sphi 0, %s138
      %s156 = sphi 0, %s156
      %s158 = sphi 0, %s156
      %s159 = sphi 0, %s158
      %s173 = sphi 0, %s159
      %s177 = sphi 0, %s177
      %s179 = sphi 0, %s177
      %s180 = sphi 0, %s179
      %s194 = sphi 0, %s180
      %s198 = sphi 0, %s198
      %s200 = sphi 0, %s198
      %s201 = sphi 0, %s200
      %s215 = sphi 0, %s201
      %s219 = sphi 0, %s219
      %s221 = sphi 0, %s219
      %s222 = sphi 0, %s221
      %s236 = sphi 0, %s222
      %s240 = sphi 0, %s240
      %s242 = sphi 0, %s240
      %s243 = sphi 0, %s242
      %s257 = sphi 0, %s243
      %s261 = sphi 0, %s261
      %s263 = sphi 0, %s261
      %s264 = sphi 0, %s263
      %s278 = sphi 0, %s264
      %s282 = sphi 0, %s282
      %s284 = sphi 0, %s282
      %s285 = sphi 0, %s284
      %s299 = sphi 0, %s285
      %s303 = sphi 0, %s303
      %s305 = sphi 0, %s303
      %s306 = sphi 0, %s305
      %s320 = sphi 0, %s306
      %s324 = sphi 0, %s324
      %s326 = sphi 0, %s324
      %s327 = sphi 0, %s326
      %s341 = sphi 0, %s327
      %s347 = sphi 0, %s349
      %s350 = sphi 0, %s347
      %s351 = sphi 0, %s350
      %s367 = sphi 0, %s351
      %s373 = sphi 0, %s375
      %s376 = sphi 0, %s373
      %s377 = sphi 0, %s376
      %s393 = sphi 0, %s377
    $region4: #{mirai_chile_forward.3} parent=1 // loop_header_branch
      %31 = sbr.rel (%p29) target = $region8
    $region5: #{mirai_chile_forward.3} parent=1 // loop_body
      %s33 = ssub.s32 %s28, 1
      %s34 = ssub.s32 %s28, 2
      %s35 = sadd.s32 %s28, 1
      %s36 = ssub.s32 %s28, %s35
      %p37 = scmp.eq.s32.totalorder %s36, 0
      %s39 = sadd.s32 %s38, 1
      %s40 = scalar_select %p37, %s38, %s39
      %p43 = pneg %p37
      %p44 = scmp.eq.s32.totalorder %s28, 1
      %p45 = por %p43, %p44
      %p46 = scmp.ne.s32.totalorder %s38, %s41
      %p47 = scmp.eq.s32.totalorder %s28, 0
      %p48 = por %p46, %p47
      %p49 = scmp.ne.s32.totalorder %s38, %s41
      %p50 = scmp.eq.s32.totalorder %s33, 1
      %p51 = por %p49, %p50
      %p52 = scmp.ne.s32.totalorder %s41, %s42
      %p53 = scmp.eq.s32.totalorder %s33, 0
      %p54 = por %p52, %p53
      %p55 = scmp.ne.s32.totalorder %s41, %s42
      %p56 = scmp.eq.s32.totalorder %s34, 1
      %p57 = por %p55, %p56
      %p59 = scmp.ne.s32.totalorder %s42, %s58
      %p60 = scmp.eq.s32.totalorder %s34, 0
      %p61 = por %p59, %p60
      %s62 = ssub.s32 %s28, %s35
      %p63 = scmp.eq.s32.totalorder %s62, 0
      %s65 = sadd.s32 %s64, 1
      %s66 = scalar_select %p63, %s64, %s65
      %p69 = pneg %p63
      %p70 = scmp.eq.s32.totalorder %s28, 1
      %p71 = por %p69, %p70
      %p72 = scmp.ne.s32.totalorder %s64, %s67
      %p73 = scmp.eq.s32.totalorder %s28, 0
      %p74 = por %p72, %p73
      %p75 = scmp.ne.s32.totalorder %s64, %s67
      %p76 = scmp.eq.s32.totalorder %s33, 1
      %p77 = por %p75, %p76
      %p78 = scmp.ne.s32.totalorder %s67, %s68
      %p79 = scmp.eq.s32.totalorder %s33, 0
      %p80 = por %p78, %p79
      %p81 = scmp.ne.s32.totalorder %s67, %s68
      %p82 = scmp.eq.s32.totalorder %s34, 1
      %p83 = por %p81, %p82
      %p85 = scmp.ne.s32.totalorder %s68, %s84
      %p86 = scmp.eq.s32.totalorder %s34, 0
      %p87 = por %p85, %p86
      %s88 = ssub.s32 %s28, %s35
      %p89 = scmp.eq.s32.totalorder %s88, 0
      %s91 = sadd.s32 %s90, 1
      %s92 = scalar_select %p89, %s90, %s91
      %p95 = pneg %p89
      %p96 = scmp.eq.s32.totalorder %s28, 1
      %p97 = por %p95, %p96
      %p98 = scmp.ne.s32.totalorder %s90, %s93
      %p99 = scmp.eq.s32.totalorder %s28, 0
      %p100 = por %p98, %p99
      %p101 = scmp.ne.s32.totalorder %s90, %s93
      %p102 = scmp.eq.s32.totalorder %s33, 1
      %p103 = por %p101, %p102
      %p104 = scmp.ne.s32.totalorder %s93, %s94
      %p105 = scmp.eq.s32.totalorder %s33, 0
      %p106 = por %p104, %p105
      %p107 = scmp.ne.s32.totalorder %s93, %s94
      %p108 = scmp.eq.s32.totalorder %s34, 1
      %p109 = por %p107, %p108
      %p111 = scmp.ne.s32.totalorder %s94, %s110
      %p112 = scmp.eq.s32.totalorder %s34, 0
      %p113 = por %p111, %p112
      %s115 = sadd.s32 %s114, 1
      %p118 = scmp.eq.s32.totalorder %s28, 1
      %p119 = scmp.ne.s32.totalorder %s114, %s116
      %p120 = scmp.eq.s32.totalorder %s28, 0
      %p121 = por %p119, %p120
      %p122 = scmp.ne.s32.totalorder %s114, %s116
      %p123 = scmp.eq.s32.totalorder %s33, 1
      %p124 = por %p122, %p123
      %p125 = scmp.ne.s32.totalorder %s116, %s117
      %p126 = scmp.eq.s32.totalorder %s33, 0
      %p127 = por %p125, %p126
      %p128 = scmp.ne.s32.totalorder %s116, %s117
      %p129 = scmp.eq.s32.totalorder %s34, 1
      %p130 = por %p128, %p129
      %p132 = scmp.ne.s32.totalorder %s117, %s131
      %p133 = scmp.eq.s32.totalorder %s34, 0
      %p134 = por %p132, %p133
      %s136 = sadd.s32 %s135, 1
      %p139 = scmp.eq.s32.totalorder %s28, 1
      %p140 = scmp.ne.s32.totalorder %s135, %s137
      %p141 = scmp.eq.s32.totalorder %s28, 0
      %p142 = por %p140, %p141
      %p143 = scmp.ne.s32.totalorder %s135, %s137
      %p144 = scmp.eq.s32.totalorder %s33, 1
      %p145 = por %p143, %p144
      %p146 = scmp.ne.s32.totalorder %s137, %s138
      %p147 = scmp.eq.s32.totalorder %s33, 0
      %p148 = por %p146, %p147
      %p149 = scmp.ne.s32.totalorder %s137, %s138
      %p150 = scmp.eq.s32.totalorder %s34, 1
      %p151 = por %p149, %p150
      %p153 = scmp.ne.s32.totalorder %s138, %s152
      %p154 = scmp.eq.s32.totalorder %s34, 0
      %p155 = por %p153, %p154
      %s157 = sadd.s32 %s156, 1
      %p160 = scmp.eq.s32.totalorder %s28, 1
      %p161 = scmp.ne.s32.totalorder %s156, %s158
      %p162 = scmp.eq.s32.totalorder %s28, 0
      %p163 = por %p161, %p162
      %p164 = scmp.ne.s32.totalorder %s156, %s158
      %p165 = scmp.eq.s32.totalorder %s33, 1
      %p166 = por %p164, %p165
      %p167 = scmp.ne.s32.totalorder %s158, %s159
      %p168 = scmp.eq.s32.totalorder %s33, 0
      %p169 = por %p167, %p168
      %p170 = scmp.ne.s32.totalorder %s158, %s159
      %p171 = scmp.eq.s32.totalorder %s34, 1
      %p172 = por %p170, %p171
      %p174 = scmp.ne.s32.totalorder %s159, %s173
      %p175 = scmp.eq.s32.totalorder %s34, 0
      %p176 = por %p174, %p175
      %s178 = sadd.s32 %s177, 1
      %p181 = scmp.eq.s32.totalorder %s28, 1
      %p182 = scmp.ne.s32.totalorder %s177, %s179
      %p183 = scmp.eq.s32.totalorder %s28, 0
      %p184 = por %p182, %p183
      %p185 = scmp.ne.s32.totalorder %s177, %s179
      %p186 = scmp.eq.s32.totalorder %s33, 1
      %p187 = por %p185, %p186
      %p188 = scmp.ne.s32.totalorder %s179, %s180
      %p189 = scmp.eq.s32.totalorder %s33, 0
      %p190 = por %p188, %p189
      %p191 = scmp.ne.s32.totalorder %s179, %s180
      %p192 = scmp.eq.s32.totalorder %s34, 1
      %p193 = por %p191, %p192
      %p195 = scmp.ne.s32.totalorder %s180, %s194
      %p196 = scmp.eq.s32.totalorder %s34, 0
      %p197 = por %p195, %p196
      %s199 = sadd.s32 %s198, 1
      %p202 = scmp.eq.s32.totalorder %s28, 1
      %p203 = scmp.ne.s32.totalorder %s198, %s200
      %p204 = scmp.eq.s32.totalorder %s28, 0
      %p205 = por %p203, %p204
      %p206 = scmp.ne.s32.totalorder %s198, %s200
      %p207 = scmp.eq.s32.totalorder %s33, 1
      %p208 = por %p206, %p207
      %p209 = scmp.ne.s32.totalorder %s200, %s201
      %p210 = scmp.eq.s32.totalorder %s33, 0
      %p211 = por %p209, %p210
      %p212 = scmp.ne.s32.totalorder %s200, %s201
      %p213 = scmp.eq.s32.totalorder %s34, 1
      %p214 = por %p212, %p213
      %p216 = scmp.ne.s32.totalorder %s201, %s215
      %p217 = scmp.eq.s32.totalorder %s34, 0
      %p218 = por %p216, %p217
      %s220 = sadd.s32 %s219, 1
      %p223 = scmp.eq.s32.totalorder %s28, 1
      %p224 = scmp.ne.s32.totalorder %s219, %s221
      %p225 = scmp.eq.s32.totalorder %s28, 0
      %p226 = por %p224, %p225
      %p227 = scmp.ne.s32.totalorder %s219, %s221
      %p228 = scmp.eq.s32.totalorder %s33, 1
      %p229 = por %p227, %p228
      %p230 = scmp.ne.s32.totalorder %s221, %s222
      %p231 = scmp.eq.s32.totalorder %s33, 0
      %p232 = por %p230, %p231
      %p233 = scmp.ne.s32.totalorder %s221, %s222
      %p234 = scmp.eq.s32.totalorder %s34, 1
      %p235 = por %p233, %p234
      %p237 = scmp.ne.s32.totalorder %s222, %s236
      %p238 = scmp.eq.s32.totalorder %s34, 0
      %p239 = por %p237, %p238
      %s241 = sadd.s32 %s240, 1
      %p244 = scmp.eq.s32.totalorder %s28, 1
      %p245 = scmp.ne.s32.totalorder %s240, %s242
      %p246 = scmp.eq.s32.totalorder %s28, 0
      %p247 = por %p245, %p246
      %p248 = scmp.ne.s32.totalorder %s240, %s242
      %p249 = scmp.eq.s32.totalorder %s33, 1
      %p250 = por %p248, %p249
      %p251 = scmp.ne.s32.totalorder %s242, %s243
      %p252 = scmp.eq.s32.totalorder %s33, 0
      %p253 = por %p251, %p252
      %p254 = scmp.ne.s32.totalorder %s242, %s243
      %p255 = scmp.eq.s32.totalorder %s34, 1
      %p256 = por %p254, %p255
      %p258 = scmp.ne.s32.totalorder %s243, %s257
      %p259 = scmp.eq.s32.totalorder %s34, 0
      %p260 = por %p258, %p259
      %s262 = sadd.s32 %s261, 1
      %p265 = scmp.eq.s32.totalorder %s28, 1
      %p266 = scmp.ne.s32.totalorder %s261, %s263
      %p267 = scmp.eq.s32.totalorder %s28, 0
      %p268 = por %p266, %p267
      %p269 = scmp.ne.s32.totalorder %s261, %s263
      %p270 = scmp.eq.s32.totalorder %s33, 1
      %p271 = por %p269, %p270
      %p272 = scmp.ne.s32.totalorder %s263, %s264
      %p273 = scmp.eq.s32.totalorder %s33, 0
      %p274 = por %p272, %p273
      %p275 = scmp.ne.s32.totalorder %s263, %s264
      %p276 = scmp.eq.s32.totalorder %s34, 1
      %p277 = por %p275, %p276
      %p279 = scmp.ne.s32.totalorder %s264, %s278
      %p280 = scmp.eq.s32.totalorder %s34, 0
      %p281 = por %p279, %p280
      %s283 = sadd.s32 %s282, 1
      %p286 = scmp.eq.s32.totalorder %s28, 1
      %p287 = scmp.ne.s32.totalorder %s282, %s284
      %p288 = scmp.eq.s32.totalorder %s28, 0
      %p289 = por %p287, %p288
      %p290 = scmp.ne.s32.totalorder %s282, %s284
      %p291 = scmp.eq.s32.totalorder %s33, 1
      %p292 = por %p290, %p291
      %p293 = scmp.ne.s32.totalorder %s284, %s285
      %p294 = scmp.eq.s32.totalorder %s33, 0
      %p295 = por %p293, %p294
      %p296 = scmp.ne.s32.totalorder %s284, %s285
      %p297 = scmp.eq.s32.totalorder %s34, 1
      %p298 = por %p296, %p297
      %p300 = scmp.ne.s32.totalorder %s285, %s299
      %p301 = scmp.eq.s32.totalorder %s34, 0
      %p302 = por %p300, %p301
      %s304 = sadd.s32 %s303, 1
      %p307 = scmp.eq.s32.totalorder %s28, 1
      %p308 = scmp.ne.s32.totalorder %s303, %s305
      %p309 = scmp.eq.s32.totalorder %s28, 0
      %p310 = por %p308, %p309
      %p311 = scmp.ne.s32.totalorder %s303, %s305
      %p312 = scmp.eq.s32.totalorder %s33, 1
      %p313 = por %p311, %p312
      %p314 = scmp.ne.s32.totalorder %s305, %s306
      %p315 = scmp.eq.s32.totalorder %s33, 0
      %p316 = por %p314, %p315
      %p317 = scmp.ne.s32.totalorder %s305, %s306
      %p318 = scmp.eq.s32.totalorder %s34, 1
      %p319 = por %p317, %p318
      %p321 = scmp.ne.s32.totalorder %s306, %s320
      %p322 = scmp.eq.s32.totalorder %s34, 0
      %p323 = por %p321, %p322
      %s325 = sadd.s32 %s324, 1
      %p328 = scmp.eq.s32.totalorder %s28, 1
      %p329 = scmp.ne.s32.totalorder %s324, %s326
      %p330 = scmp.eq.s32.totalorder %s28, 0
      %p331 = por %p329, %p330
      %p332 = scmp.ne.s32.totalorder %s324, %s326
      %p333 = scmp.eq.s32.totalorder %s33, 1
      %p334 = por %p332, %p333
      %p335 = scmp.ne.s32.totalorder %s326, %s327
      %p336 = scmp.eq.s32.totalorder %s33, 0
      %p337 = por %p335, %p336
      %p338 = scmp.ne.s32.totalorder %s326, %s327
      %p339 = scmp.eq.s32.totalorder %s34, 1
      %p340 = por %p338, %p339
      %p342 = scmp.ne.s32.totalorder %s327, %s341
      %p343 = scmp.eq.s32.totalorder %s34, 0
      %p344 = por %p342, %p343
      %s345 = ssub.s32 %s28, %s35
      %p346 = scmp.eq.s32.totalorder %s345, 0
      %s348 = sadd.s32 %s347, 1
      %s349 = scalar_select %p346, %s347, %s348
      %p352 = pneg %p346
      %p353 = scmp.eq.s32.totalorder %s28, 1
      %p354 = por %p352, %p353
      %p355 = scmp.ne.s32.totalorder %s347, %s350
      %p356 = scmp.eq.s32.totalorder %s28, 0
      %p357 = por %p355, %p356
      %p358 = scmp.ne.s32.totalorder %s347, %s350
      %p359 = scmp.eq.s32.totalorder %s33, 1
      %p360 = por %p358, %p359
      %p361 = scmp.ne.s32.totalorder %s350, %s351
      %p362 = scmp.eq.s32.totalorder %s33, 0
      %p363 = por %p361, %p362
      %p364 = scmp.ne.s32.totalorder %s350, %s351
      %p365 = scmp.eq.s32.totalorder %s34, 1
      %p366 = por %p364, %p365
      %p368 = scmp.ne.s32.totalorder %s351, %s367
      %p369 = scmp.eq.s32.totalorder %s34, 0
      %p370 = por %p368, %p369
      %s371 = ssub.s32 %s28, %s35
      %p372 = scmp.eq.s32.totalorder %s371, 0
      %s374 = sadd.s32 %s373, 1
      %s375 = scalar_select %p372, %s373, %s374
      %p378 = pneg %p372
      %p379 = scmp.eq.s32.totalorder %s28, 1
      %p380 = por %p378, %p379
      %p381 = scmp.ne.s32.totalorder %s373, %s376
      %p382 = scmp.eq.s32.totalorder %s28, 0
      %p383 = por %p381, %p382
      %p384 = scmp.ne.s32.totalorder %s373, %s376
      %p385 = scmp.eq.s32.totalorder %s33, 1
      %p386 = por %p384, %p385
      %p387 = scmp.ne.s32.totalorder %s376, %s377
      %p388 = scmp.eq.s32.totalorder %s33, 0
      %p389 = por %p387, %p388
      %p390 = scmp.ne.s32.totalorder %s376, %s377
      %p391 = scmp.eq.s32.totalorder %s34, 1
      %p392 = por %p390, %p391
      %p394 = scmp.ne.s32.totalorder %s377, %s393
      %p395 = scmp.eq.s32.totalorder %s34, 0
      %p396 = por %p394, %p395
      %p397 = scmp.le.s32.totalorder 1, %s28
      %p398 = scmp.lt.s32.totalorder %s28, 3
      %p399 = pnand %p397, %p398
      %p400 = pneg %p399
      // Predicated region
      $region9: #{mirai_chile_forward.3} parent=5 // pred_check
        _
      $region10: #{mirai_chile_forward.3} parent=5 // pred_check_branch
        %402 = sbr.rel (%p399) target = $region12
      $region11: #{mirai_chile_forward.3} parent=5 // pred_region
        %s403 = ssub.s32 %s28, 1
        // Predicated region
        $region13: #{mirai_chile_forward.3} parent=11 // pred_check
          %p404 = pneg %p127
        $region14: #{mirai_chile_forward.3} parent=11 // pred_check_branch
          %406 = sbr.rel (%p404) target = $region16
        $region15: #{mirai_chile_forward.3} parent=11 // pred_region
          _
        $region16: #{mirai_chile_forward.3} parent=11 // pred_fallthru
          _
        // Predicated region
        $region17: #{mirai_chile_forward.3} parent=11 // pred_check
          %p407 = pneg %p148
        $region18: #{mirai_chile_forward.3} parent=11 // pred_check_branch
          %409 = sbr.rel (%p407) target = $region20
        $region19: #{mirai_chile_forward.3} parent=11 // pred_region
          _
        $region20: #{mirai_chile_forward.3} parent=11 // pred_fallthru
          _
        // Predicated region
        $region21: #{mirai_chile_forward.3} parent=11 // pred_check
          %p410 = pneg %p169
        $region22: #{mirai_chile_forward.3} parent=11 // pred_check_branch
          %412 = sbr.rel (%p410) target = $region24
        $region23: #{mirai_chile_forward.3} parent=11 // pred_region
          _
        $region24: #{mirai_chile_forward.3} parent=11 // pred_fallthru
          _
        // Predicated region
        $region25: #{mirai_chile_forward.3} parent=11 // pred_check
          %p413 = pneg %p190
        $region26: #{mirai_chile_forward.3} parent=11 // pred_check_branch
          %415 = sbr.rel (%p413) target = $region28
        $region27: #{mirai_chile_forward.3} parent=11 // pred_region
          _
        $region28: #{mirai_chile_forward.3} parent=11 // pred_fallthru
          _
        // Predicated region
        $region29: #{mirai_chile_forward.3} parent=11 // pred_check
          %p416 = pneg %p211
        $region30: #{mirai_chile_forward.3} parent=11 // pred_check_branch
          %418 = sbr.rel (%p416) target = $region32
        $region31: #{mirai_chile_forward.3} parent=11 // pred_region
          _
        $region32: #{mirai_chile_forward.3} parent=11 // pred_fallthru
          _
        // Predicated region
        $region33: #{mirai_chile_forward.3} parent=11 // pred_check
          %p419 = pneg %p232
        $region34: #{mirai_chile_forward.3} parent=11 // pred_check_branch
          %421 = sbr.rel (%p419) target = $region36
        $region35: #{mirai_chile_forward.3} parent=11 // pred_region
          _
        $region36: #{mirai_chile_forward.3} parent=11 // pred_fallthru
          _
        // Predicated region
        $region37: #{mirai_chile_forward.3} parent=11 // pred_check
          %p422 = pneg %p253
        $region38: #{mirai_chile_forward.3} parent=11 // pred_check_branch
          %424 = sbr.rel (%p422) target = $region40
        $region39: #{mirai_chile_forward.3} parent=11 // pred_region
          _
        $region40: #{mirai_chile_forward.3} parent=11 // pred_fallthru
          _
        // Predicated region
        $region41: #{mirai_chile_forward.3} parent=11 // pred_check
          %p425 = pneg %p274
        $region42: #{mirai_chile_forward.3} parent=11 // pred_check_branch
          %427 = sbr.rel (%p425) target = $region44
        $region43: #{mirai_chile_forward.3} parent=11 // pred_region
          _
        $region44: #{mirai_chile_forward.3} parent=11 // pred_fallthru
          _
        // Predicated region
        $region45: #{mirai_chile_forward.3} parent=11 // pred_check
          %p428 = pneg %p295
        $region46: #{mirai_chile_forward.3} parent=11 // pred_check_branch
          %430 = sbr.rel (%p428) target = $region48
        $region47: #{mirai_chile_forward.3} parent=11 // pred_region
          _
        $region48: #{mirai_chile_forward.3} parent=11 // pred_fallthru
          _
        // Predicated region
        $region49: #{mirai_chile_forward.3} parent=11 // pred_check
          %p431 = pneg %p316
        $region50: #{mirai_chile_forward.3} parent=11 // pred_check_branch
          %433 = sbr.rel (%p431) target = $region52
        $region51: #{mirai_chile_forward.3} parent=11 // pred_region
          _
        $region52: #{mirai_chile_forward.3} parent=11 // pred_fallthru
          _
        // Predicated region
        $region53: #{mirai_chile_forward.3} parent=11 // pred_check
          %p434 = pneg %p337
        $region54: #{mirai_chile_forward.3} parent=11 // pred_check_branch
          %436 = sbr.rel (%p434) target = $region56
        $region55: #{mirai_chile_forward.3} parent=11 // pred_region
          _
        $region56: #{mirai_chile_forward.3} parent=11 // pred_fallthru
          _
      $region12: #{mirai_chile_forward.3} parent=5 // pred_fallthru
        _
      %p437 = scmp.lt.s32.totalorder %s28, 2
      // Predicated region
      $region57: #{mirai_chile_forward.3} parent=5 // pred_check
        %p438 = pneg %p437
      $region58: #{mirai_chile_forward.3} parent=5 // pred_check_branch
        %440 = sbr.rel (%p438) target = $region60
      $region59: #{mirai_chile_forward.3} parent=5 // pred_region
        // Predicated region
        $region61: #{mirai_chile_forward.3} parent=59 // pred_check
          %p441 = pneg %p48
        $region62: #{mirai_chile_forward.3} parent=59 // pred_check_branch
          %443 = sbr.rel (%p441) target = $region64
        $region63: #{mirai_chile_forward.3} parent=59 // pred_region
          %p444 = scmp.lt.s32.totalorder %s28, 1
          %s445 = scalar_select %p444, %s28, 1
          %s446 = smul.addr %s445, 4
          %s447 = scalar_lea.vmem %s0, %s446
        $region64: #{mirai_chile_forward.3} parent=59 // pred_fallthru
          _
        // Predicated region
        $region65: #{mirai_chile_forward.3} parent=59 // pred_check
          %p448 = pneg %p74
        $region66: #{mirai_chile_forward.3} parent=59 // pred_check_branch
          %450 = sbr.rel (%p448) target = $region68
        $region67: #{mirai_chile_forward.3} parent=59 // pred_region
          %p451 = scmp.lt.s32.totalorder %s28, 1
          %s452 = scalar_select %p451, %s28, 1
          %s453 = smul.addr %s452, 4
          %s454 = scalar_lea.vmem %s1, %s453
        $region68: #{mirai_chile_forward.3} parent=59 // pred_fallthru
          _
        // Predicated region
        $region69: #{mirai_chile_forward.3} parent=59 // pred_check
          %p455 = pneg %p100
        $region70: #{mirai_chile_forward.3} parent=59 // pred_check_branch
          %457 = sbr.rel (%p455) target = $region72
        $region71: #{mirai_chile_forward.3} parent=59 // pred_region
          %p458 = scmp.lt.s32.totalorder %s28, 1
          %s459 = scalar_select %p458, %s28, 1
          %s460 = smul.addr %s459, 4
          %s461 = scalar_lea.vmem %s2, %s460
        $region72: #{mirai_chile_forward.3} parent=59 // pred_fallthru
          _
      $region60: #{mirai_chile_forward.3} parent=5 // pred_fallthru
        _
      %p462 = scmp.le.s32.totalorder 1, %s28
      %p463 = scmp.lt.s32.totalorder %s28, 3
      %p464 = pnand %p462, %p463
      %p465 = pneg %p464
      // Predicated region
      $region73: #{mirai_chile_forward.3} parent=5 // pred_check
        _
      $region74: #{mirai_chile_forward.3} parent=5 // pred_check_branch
        %467 = sbr.rel (%p464) target = $region76
      $region75: #{mirai_chile_forward.3} parent=5 // pred_region
        %s468 = ssub.s32 %s28, 1
        %p469 = scmp.lt.s32.totalorder %s33, 1
        %s470 = scalar_select %p469, %s33, 1
        %s471 = smul.addr %s470, 4
        %s472 = scalar_lea.vmem %s0, %s471
        %p473 = pneg %p54
        %p474 = pneg %p51
        %p475 = scmp.lt.s32.totalorder %s33, 1
        %s476 = scalar_select %p475, %s33, 1
        %s477 = smul.addr %s476, 4
        %s478 = scalar_lea.vmem %s1, %s477
        %p479 = pneg %p80
        %p480 = pneg %p77
        %p481 = scmp.lt.s32.totalorder %s33, 1
        %s482 = scalar_select %p481, %s33, 1
        %s483 = smul.addr %s482, 4
        %s484 = scalar_lea.vmem %s2, %s483
        %p485 = pneg %p106
        %p486 = pneg %p103
        %p487 = pneg %p127
        %p488 = pneg %p124
        %p489 = pneg %p148
        %p490 = pneg %p145
        %p491 = pneg %p169
        %p492 = pneg %p166
        %p493 = pneg %p190
        %p494 = pneg %p187
        %p495 = pneg %p211
        %p496 = pneg %p208
        %p497 = pneg %p232
        %p498 = pneg %p229
        %p499 = pneg %p253
        %p500 = pneg %p250
        %p501 = pneg %p274
        %p502 = pneg %p271
        %p503 = pneg %p295
        %p504 = pneg %p292
        %p505 = pneg %p316
        %p506 = pneg %p313
        %p507 = pneg %p337
        %p508 = pneg %p334
        %p509 = pneg %p363
        %p510 = pneg %p360
        %s511 = sand.u32 %s350, 1
        %s512 = scalar_lea.sflag [#allocation3], %s511
        %s513 = sand.u32 %s350, 1
        %s514 = scalar_lea.vmem [#allocation2], %s513
        %p515 = pneg %p389
        %p516 = pneg %p386
        %s517 = sand.u32 %s376, 1
        %s518 = scalar_lea.sflag [#allocation5], %s517
        %s519 = sand.u32 %s376, 1
        %s520 = scalar_lea.vmem [#allocation4], %s519
        %p521 = scmp.lt.s32.totalorder %s33, 1
        %s522 = scalar_select %p521, %s33, 1
        %s523 = smul.addr %s522, 4
        %s524 = scalar_lea.vmem %s0, %s523
        %p525 = scmp.lt.s32.totalorder %s33, 1
        %s526 = scalar_select %p525, %s33, 1
        %s527 = smul.addr %s526, 4
        %s528 = scalar_lea.vmem %s1, %s527
        %p529 = scmp.lt.s32.totalorder %s33, 1
        %s530 = scalar_select %p529, %s33, 1
        %s531 = smul.addr %s530, 4
        %s532 = scalar_lea.vmem %s2, %s531
        %v534 = vld [vmem:[%s524] sm:$0xf]
        %v535 = vld [vmem:[%s528] sm:$0xf]
        %537 = vset.pattern.permute.xlu0 0
        %538 = vperm.xlu0 %537, %v535
        %v539 = vpop.permute.xlu0 %538
        %v541 = vmul.f32 %v539, %v534
        %v542 = vsub.f32 1.0, %v535
        %v543 = vld [vmem:[%s3] sm:$0x1]
        %545 = vset.pattern.permute.xlu0 0
        %546 = vperm.xlu0 %545, %v542
        %v547 = vpop.permute.xlu0 %546
        %v550 = vperm.slane %v543, 0
        %v552 = vmul.f32 %v547, %v550
        %v553 = vadd.f32 %v541, %v552
        %v554 = vpack.c.bf16 %v553, %v553
        %v555 = vld [vmem:[%s4] sm:$0xf]
        %v556 = vld [vmem:[%s4 + $0x4] sm:$0xf]
        %v557 = vld [vmem:[%s4 + $0x8] sm:$0xf]
        %v558 = vld [vmem:[%s4 + $0xc] sm:$0xf]
        %v559 = vld [vmem:[%s4 + $0x10] sm:$0xf]
        %v560 = vld [vmem:[%s4 + $0x14] sm:$0xf]
        %v561 = vld [vmem:[%s4 + $0x18] sm:$0xf]
        %v562 = vld [vmem:[%s4 + $0x1c] sm:$0xf]
        %v563 = vld [vmem:[%s4 + $0x20] sm:$0xf]
        %v564 = vld [vmem:[%s4 + $0x24] sm:$0xf]
        %v565 = vld [vmem:[%s4 + $0x28] sm:$0xf]
        %v566 = vld [vmem:[%s4 + $0x2c] sm:$0xf]
        %v567 = vld [vmem:[%s4 + $0x30] sm:$0xf]
        %v568 = vld [vmem:[%s4 + $0x34] sm:$0xf]
        %v569 = vld [vmem:[%s4 + $0x38] sm:$0xf]
        %v570 = vld [vmem:[%s4 + $0x3c] sm:$0xf]
        %v571 = vld [vmem:[%s5] sm:$0x1]
        %v573 = vperm.slane %v571, 0
        %v591 = vunpack.c.l.b16 %v555
        %v592 = vunpack.c.l.b16 %v556
        %v593 = vunpack.c.l.b16 %v557
        %v594 = vunpack.c.l.b16 %v558
        %v595 = vunpack.c.l.b16 %v559
        %v596 = vunpack.c.l.b16 %v560
        %v597 = vunpack.c.l.b16 %v561
        %v598 = vunpack.c.l.b16 %v562
        %v599 = vunpack.c.l.b16 %v563
        %v600 = vunpack.c.l.b16 %v564
        %v601 = vunpack.c.l.b16 %v565
        %v602 = vunpack.c.l.b16 %v566
        %v603 = vunpack.c.l.b16 %v567
        %v604 = vunpack.c.l.b16 %v568
        %v605 = vunpack.c.l.b16 %v569
        %v606 = vunpack.c.l.b16 %v570
        %v607 = vpack.c.b16 %v592, %v591
        %v608 = vpack.c.b16 %v594, %v593
        %v609 = vpack.c.b16 %v596, %v595
        %v610 = vpack.c.b16 %v598, %v597
        %v611 = vpack.c.b16 %v600, %v599
        %v612 = vpack.c.b16 %v602, %v601
        %v613 = vpack.c.b16 %v604, %v603
        %v614 = vpack.c.b16 %v606, %v605
        %623 = vmatpush.bf16.msra.mxu0 %v614
        %624 = vmatpush.bf16.msra.mxu0 %v613
        %625 = vmatpush.bf16.msra.mxu0 %v612
        %626 = vmatpush.bf16.msra.mxu0 %v611
        %627 = vmatpush.bf16.msra.mxu0 %v610
        %628 = vmatpush.bf16.msra.mxu0 %v609
        %629 = vmatpush.bf16.msra.mxu0 %v608
        %630 = vmatpush.bf16.msra.mxu0 %v607
        %631 = vmatmul.bf16.gmra.mxu0 %v554
        %v632 = vpop.f32.mrf.mxu0
        %v633 = vadd.f32 %v573, %v632
        %v634 = vpop.f32.mrf.mxu0
        %635 = vdwg.mxu0
        %v636 = vld [vmem:[%s532] sm:$0xf]
        %v637 = vadd.f32 %v633, %v636
        %v638 = vpack.c.bf16 %v637, %v637
        %v639 = vld [vmem:[%s6] sm:$0xff]
        %v640 = vld [vmem:[%s6 + $0x8] sm:$0xf]
        %v641 = vld [vmem:[%s6 + $0xc] sm:$0xff]
        %v642 = vld [vmem:[%s6 + $0x14] sm:$0xf]
        %v643 = vld [vmem:[%s6 + $0x18] sm:$0xff]
        %v644 = vld [vmem:[%s6 + $0x20] sm:$0xf]
        %v645 = vld [vmem:[%s6 + $0x24] sm:$0xff]
        %v646 = vld [vmem:[%s6 + $0x2c] sm:$0xf]
        %v647 = vld [vmem:[%s6 + $0x30] sm:$0xff]
        %v648 = vld [vmem:[%s6 + $0x38] sm:$0xf]
        %v649 = vld [vmem:[%s6 + $0x3c] sm:$0xff]
        %v650 = vld [vmem:[%s6 + $0x44] sm:$0xf]
        %v651 = vld [vmem:[%s6 + $0x48] sm:$0xff]
        %v652 = vld [vmem:[%s6 + $0x50] sm:$0xf]
        %v653 = vld [vmem:[%s6 + $0x54] sm:$0xff]
        %v654 = vld [vmem:[%s6 + $0x5c] sm:$0xf]
        %v655 = vld [vmem:[%s6 + $0x60] sm:$0xff]
        %v656 = vld [vmem:[%s6 + $0x68] sm:$0xf]
        %v657 = vld [vmem:[%s6 + $0x6c] sm:$0xff]
        %v658 = vld [vmem:[%s6 + $0x74] sm:$0xf]
        %v659 = vld [vmem:[%s6 + $0x78] sm:$0xff]
        %v660 = vld [vmem:[%s6 + $0x80] sm:$0xf]
        %v661 = vld [vmem:[%s6 + $0x84] sm:$0xff]
        %v662 = vld [vmem:[%s6 + $0x8c] sm:$0xf]
        %v663 = vld [vmem:[%s6 + $0x90] sm:$0xff]
        %v664 = vld [vmem:[%s6 + $0x98] sm:$0xf]
        %v665 = vld [vmem:[%s6 + $0x9c] sm:$0xff]
        %v666 = vld [vmem:[%s6 + $0xa4] sm:$0xf]
        %v667 = vld [vmem:[%s6 + $0xa8] sm:$0xff]
        %v668 = vld [vmem:[%s6 + $0xb0] sm:$0xf]
        %v669 = vld [vmem:[%s6 + $0xb4] sm:$0xff]
        %v670 = vld [vmem:[%s6 + $0xbc] sm:$0xf]
        %v703 = vunpack.c.l.b16 %v639
        %v704 = vunpack.c.h.b16 %v639
        %v705 = vunpack.c.l.b16 %v640
        %v706 = vunpack.c.l.b16 %v641
        %v707 = vunpack.c.h.b16 %v641
        %v708 = vunpack.c.l.b16 %v642
        %v709 = vunpack.c.l.b16 %v643
        %v710 = vunpack.c.h.b16 %v643
        %v711 = vunpack.c.l.b16 %v644
        %v712 = vunpack.c.l.b16 %v645
        %v713 = vunpack.c.h.b16 %v645
        %v714 = vunpack.c.l.b16 %v646
        %v715 = vunpack.c.l.b16 %v647
        %v716 = vunpack.c.h.b16 %v647
        %v717 = vunpack.c.l.b16 %v648
        %v718 = vunpack.c.l.b16 %v649
        %v719 = vunpack.c.h.b16 %v649
        %v720 = vunpack.c.l.b16 %v650
        %v721 = vunpack.c.l.b16 %v651
        %v722 = vunpack.c.h.b16 %v651
        %v723 = vunpack.c.l.b16 %v652
        %v724 = vunpack.c.l.b16 %v653
        %v725 = vunpack.c.h.b16 %v653
        %v726 = vunpack.c.l.b16 %v654
        %v727 = vunpack.c.l.b16 %v655
        %v728 = vunpack.c.h.b16 %v655
        %v729 = vunpack.c.l.b16 %v656
        %v730 = vunpack.c.l.b16 %v657
        %v731 = vunpack.c.h.b16 %v657
        %v732 = vunpack.c.l.b16 %v658
        %v733 = vunpack.c.l.b16 %v659
        %v734 = vunpack.c.h.b16 %v659
        %v735 = vunpack.c.l.b16 %v660
        %v736 = vunpack.c.l.b16 %v661
        %v737 = vunpack.c.h.b16 %v661
        %v738 = vunpack.c.l.b16 %v662
        %v739 = vunpack.c.l.b16 %v663
        %v740 = vunpack.c.h.b16 %v663
        %v741 = vunpack.c.l.b16 %v664
        %v742 = vunpack.c.l.b16 %v665
        %v743 = vunpack.c.h.b16 %v665
        %v744 = vunpack.c.l.b16 %v666
        %v745 = vunpack.c.l.b16 %v667
        %v746 = vunpack.c.h.b16 %v667
        %v747 = vunpack.c.l.b16 %v668
        %v748 = vunpack.c.l.b16 %v669
        %v749 = vunpack.c.h.b16 %v669
        %v750 = vunpack.c.l.b16 %v670
        %v751 = vpack.c.b16 %v706, %v703
        %v752 = vpack.c.b16 %v707, %v704
        %v753 = vpack.c.b16 %v708, %v705
        %v754 = vpack.c.b16 %v712, %v709
        %v755 = vpack.c.b16 %v713, %v710
        %v756 = vpack.c.b16 %v714, %v711
        %v757 = vpack.c.b16 %v718, %v715
        %v758 = vpack.c.b16 %v719, %v716
        %v759 = vpack.c.b16 %v720, %v717
        %v760 = vpack.c.b16 %v724, %v721
        %v761 = vpack.c.b16 %v725, %v722
        %v762 = vpack.c.b16 %v726, %v723
        %v763 = vpack.c.b16 %v730, %v727
        %v764 = vpack.c.b16 %v731, %v728
        %v765 = vpack.c.b16 %v732, %v729
        %v766 = vpack.c.b16 %v736, %v733
        %v767 = vpack.c.b16 %v737, %v734
        %v768 = vpack.c.b16 %v738, %v735
        %v769 = vpack.c.b16 %v742, %v739
        %v770 = vpack.c.b16 %v743, %v740
        %v771 = vpack.c.b16 %v744, %v741
        %v772 = vpack.c.b16 %v748, %v745
        %v773 = vpack.c.b16 %v749, %v746
        %v774 = vpack.c.b16 %v750, %v747
        %799 = vmatpush.bf16.msra.mxu0 %v772
        %800 = vmatpush.bf16.msra.mxu0 %v769
        %801 = vmatpush.bf16.msra.mxu0 %v766
        %802 = vmatpush.bf16.msra.mxu0 %v763
        %803 = vmatpush.bf16.msra.mxu0 %v760
        %804 = vmatpush.bf16.msra.mxu0 %v757
        %805 = vmatpush.bf16.msra.mxu0 %v754
        %806 = vmatpush.bf16.msra.mxu0 %v751
        %807 = vmatmul.bf16.gmra.mxu0 %v638
        %v808 = vpop.f32.mrf.mxu0
        %v809 = vadd.f32 0.0, %v808
        %v810 = vpop.f32.mrf.mxu0
        %811 = vdwg.mxu0
        %812 = vmatpush.bf16.msra.mxu0 %v773
        %813 = vmatpush.bf16.msra.mxu0 %v770
        %814 = vmatpush.bf16.msra.mxu0 %v767
        %815 = vmatpush.bf16.msra.mxu0 %v764
        %816 = vmatpush.bf16.msra.mxu0 %v761
        %817 = vmatpush.bf16.msra.mxu0 %v758
        %818 = vmatpush.bf16.msra.mxu0 %v755
        %819 = vmatpush.bf16.msra.mxu0 %v752
        %820 = vmatmul.bf16.gmra.mxu0 %v638
        %v821 = vpop.f32.mrf.mxu0
        %v822 = vadd.f32 0.0, %v821
        %v823 = vpop.f32.mrf.mxu0
        %824 = vdwg.mxu0
        %825 = vmatpush.bf16.msra.mxu0 %v774
        %826 = vmatpush.bf16.msra.mxu0 %v771
        %827 = vmatpush.bf16.msra.mxu0 %v768
        %828 = vmatpush.bf16.msra.mxu0 %v765
        %829 = vmatpush.bf16.msra.mxu0 %v762
        %830 = vmatpush.bf16.msra.mxu0 %v759
        %831 = vmatpush.bf16.msra.mxu0 %v756
        %832 = vmatpush.bf16.msra.mxu0 %v753
        %833 = vmatmul.bf16.gmra.mxu0 %v638
        %v834 = vpop.f32.mrf.mxu0
        %v835 = vadd.f32 0.0, %v834
        %v836 = vpop.f32.mrf.mxu0
        %837 = vdwg.mxu0
        %v838 = vpack.c.bf16 %v809, %v809
        %v839 = vpack.c.bf16 %v822, %v822
        %840 = vmatpush.bf16.xpose.msra.mxu0 0
        %841 = vmatpush.bf16.xpose.msra.mxu0 0
        %842 = vmatpush.bf16.xpose.msra.mxu0 0
        %843 = vmatpush.bf16.xpose.msra.mxu0 0
        %844 = vmatpush.bf16.xpose.msra.mxu0 0
        %845 = vmatpush.bf16.xpose.msra.mxu0 0
        %846 = vmatpush.bf16.xpose.msra.mxu0 0
        %847 = vmatpush.bf16.xpose.msra.mxu0 %v839
        %848 = vmatmul.bf16.gmra.mxu0 %v838
        %v849 = vpop.f32.mrf.mxu0
        %v850 = vadd.f32 0.0, %v849
        %v851 = vpop.f32.mrf.mxu0
        %852 = vdwg.mxu0
        %vm853 = vcmask 27648
        %v854 = vsel %vm853, %v850, -inf
        %855 = vmax.xlane.f32.xlu0 %v854
        %v856 = vpop.xlane.xlu0 %855
        %v857 = vsub.f32 %v850, %v856
        %v858 = vmul.f32 %v857, 1.442695
        %v859 = vpow.pop %v858
        %v860 = vsel %vm853, %v859, 0.0
        %861 = vadd.xlane.f32.xlu0 %v860
        %v862 = vpop.xlane.xlu0 %861
        %v863 = vrcp.pop %v862
        %v864 = vmul.f32 %v859, %v863
        %v865 = vpack.c.bf16 %v864, %v864
        %v866 = vpack.c.bf16 %v835, %v835
        %vm867 = vcmask 31744
        %v869 = vsel %vm867, %v865, 0
        %vm871 = vcmask 1041408
        %v873 = vsel %vm871, %v866, 0
        %875 = vmatpush.bf16.msra.mxu0 0
        %876 = vmatpush.bf16.msra.mxu0 0
        %877 = vmatpush.bf16.msra.mxu0 0
        %878 = vmatpush.bf16.msra.mxu0 0
        %879 = vmatpush.bf16.msra.mxu0 0
        %880 = vmatpush.bf16.msra.mxu0 0
        %881 = vmatpush.bf16.msra.mxu0 0
        %882 = vmatpush.bf16.msra.mxu0 %v873
        %883 = vmatmul.bf16.gmra.mxu0 %v869
        %v884 = vpop.f32.mrf.mxu0
        %v885 = vadd.f32 0.0, %v884
        %v886 = vpop.f32.mrf.mxu0
        %887 = vdwg.mxu0
        %v888 = vpack.c.bf16 %v885, %v885
        %v889 = vld [vmem:[%s7] sm:$0xf]
        %v890 = vld [vmem:[%s7 + $0x4] sm:$0xf]
        %v891 = vld [vmem:[%s7 + $0x8] sm:$0xf]
        %v892 = vld [vmem:[%s7 + $0xc] sm:$0xf]
        %v893 = vld [vmem:[%s7 + $0x10] sm:$0xf]
        %v894 = vld [vmem:[%s7 + $0x14] sm:$0xf]
        %v895 = vld [vmem:[%s7 + $0x18] sm:$0xf]
        %v896 = vld [vmem:[%s7 + $0x1c] sm:$0xf]
        %v897 = vld [vmem:[%s7 + $0x20] sm:$0xf]
        %v898 = vld [vmem:[%s7 + $0x24] sm:$0xf]
        %v899 = vld [vmem:[%s7 + $0x28] sm:$0xf]
        %v900 = vld [vmem:[%s7 + $0x2c] sm:$0xf]
        %v901 = vld [vmem:[%s7 + $0x30] sm:$0xf]
        %v902 = vld [vmem:[%s7 + $0x34] sm:$0xf]
        %v903 = vld [vmem:[%s7 + $0x38] sm:$0xf]
        %v904 = vld [vmem:[%s7 + $0x3c] sm:$0xf]
        %v921 = vunpack.c.l.b16 %v889
        %v922 = vunpack.c.l.b16 %v890
        %v923 = vunpack.c.l.b16 %v891
        %v924 = vunpack.c.l.b16 %v892
        %v925 = vunpack.c.l.b16 %v893
        %v926 = vunpack.c.l.b16 %v894
        %v927 = vunpack.c.l.b16 %v895
        %v928 = vunpack.c.l.b16 %v896
        %v929 = vunpack.c.l.b16 %v897
        %v930 = vunpack.c.l.b16 %v898
        %v931 = vunpack.c.l.b16 %v899
        %v932 = vunpack.c.l.b16 %v900
        %v933 = vunpack.c.l.b16 %v901
        %v934 = vunpack.c.l.b16 %v902
        %v935 = vunpack.c.l.b16 %v903
        %v936 = vunpack.c.l.b16 %v904
        %v937 = vpack.c.b16 %v922, %v921
        %v938 = vpack.c.b16 %v924, %v923
        %v939 = vpack.c.b16 %v926, %v925
        %v940 = vpack.c.b16 %v928, %v927
        %v941 = vpack.c.b16 %v930, %v929
        %v942 = vpack.c.b16 %v932, %v931
        %v943 = vpack.c.b16 %v934, %v933
        %v944 = vpack.c.b16 %v936, %v935
        %953 = vmatpush.bf16.msra.mxu0 %v944
        %954 = vmatpush.bf16.msra.mxu0 %v943
        %955 = vmatpush.bf16.msra.mxu0 %v942
        %956 = vmatpush.bf16.msra.mxu0 %v941
        %957 = vmatpush.bf16.msra.mxu0 %v940
        %958 = vmatpush.bf16.msra.mxu0 %v939
        %959 = vmatpush.bf16.msra.mxu0 %v938
        %960 = vmatpush.bf16.msra.mxu0 %v937
        %961 = vmatmul.bf16.gmra.mxu0 %v888
        %v962 = vpop.f32.mrf.mxu0
        %v963 = vadd.f32 0.0, %v962
        %v964 = vpop.f32.mrf.mxu0
        %965 = vdwg.mxu0
        %v966 = vadd.f32 %v637, %v963
        %v967 = vpack.c.bf16 %v966, %v966
        %v968 = vld [vmem:[%s8] sm:$0xff]
        %v969 = vld [vmem:[%s8 + $0x8] sm:$0xff]
        %v970 = vld [vmem:[%s8 + $0x10] sm:$0xff]
        %v971 = vld [vmem:[%s8 + $0x18] sm:$0xff]
        %v972 = vld [vmem:[%s8 + $0x20] sm:$0xff]
        %v973 = vld [vmem:[%s8 + $0x28] sm:$0xff]
        %v974 = vld [vmem:[%s8 + $0x30] sm:$0xff]
        %v975 = vld [vmem:[%s8 + $0x38] sm:$0xff]
        %v976 = vld [vmem:[%s8 + $0x40] sm:$0xff]
        %v977 = vld [vmem:[%s8 + $0x48] sm:$0xff]
        %v978 = vld [vmem:[%s8 + $0x50] sm:$0xff]
        %v979 = vld [vmem:[%s8 + $0x58] sm:$0xff]
        %v980 = vld [vmem:[%s8 + $0x60] sm:$0xff]
        %v981 = vld [vmem:[%s8 + $0x68] sm:$0xff]
        %v982 = vld [vmem:[%s8 + $0x70] sm:$0xff]
        %v983 = vld [vmem:[%s8 + $0x78] sm:$0xff]
        %v984 = vld [vmem:[%s9] sm:$0x3]
        %v986 = vperm.slane %v984, 0
        %v987 = vperm.slane %v984, 1
        %v1006 = vunpack.c.l.b16 %v968
        %v1007 = vunpack.c.h.b16 %v968
        %v1008 = vunpack.c.l.b16 %v969
        %v1009 = vunpack.c.h.b16 %v969
        %v1010 = vunpack.c.l.b16 %v970
        %v1011 = vunpack.c.h.b16 %v970
        %v1012 = vunpack.c.l.b16 %v971
        %v1013 = vunpack.c.h.b16 %v971
        %v1014 = vunpack.c.l.b16 %v972
        %v1015 = vunpack.c.h.b16 %v972
        %v1016 = vunpack.c.l.b16 %v973
        %v1017 = vunpack.c.h.b16 %v973
        %v1018 = vunpack.c.l.b16 %v974
        %v1019 = vunpack.c.h.b16 %v974
        %v1020 = vunpack.c.l.b16 %v975
        %v1021 = vunpack.c.h.b16 %v975
        %v1022 = vunpack.c.l.b16 %v976
        %v1023 = vunpack.c.h.b16 %v976
        %v1024 = vunpack.c.l.b16 %v977
        %v1025 = vunpack.c.h.b16 %v977
        %v1026 = vunpack.c.l.b16 %v978
        %v1027 = vunpack.c.h.b16 %v978
        %v1028 = vunpack.c.l.b16 %v979
        %v1029 = vunpack.c.h.b16 %v979
        %v1030 = vunpack.c.l.b16 %v980
        %v1031 = vunpack.c.h.b16 %v980
        %v1032 = vunpack.c.l.b16 %v981
        %v1033 = vunpack.c.h.b16 %v981
        %v1034 = vunpack.c.l.b16 %v982
        %v1035 = vunpack.c.h.b16 %v982
        %v1036 = vunpack.c.l.b16 %v983
        %v1037 = vunpack.c.h.b16 %v983
        %v1038 = vpack.c.b16 %v1008, %v1006
        %v1039 = vpack.c.b16 %v1009, %v1007
        %v1040 = vpack.c.b16 %v1012, %v1010
        %v1041 = vpack.c.b16 %v1013, %v1011
        %v1042 = vpack.c.b16 %v1016, %v1014
        %v1043 = vpack.c.b16 %v1017, %v1015
        %v1044 = vpack.c.b16 %v1020, %v1018
        %v1045 = vpack.c.b16 %v1021, %v1019
        %v1046 = vpack.c.b16 %v1024, %v1022
        %v1047 = vpack.c.b16 %v1025, %v1023
        %v1048 = vpack.c.b16 %v1028, %v1026
        %v1049 = vpack.c.b16 %v1029, %v1027
        %v1050 = vpack.c.b16 %v1032, %v1030
        %v1051 = vpack.c.b16 %v1033, %v1031
        %v1052 = vpack.c.b16 %v1036, %v1034
        %v1053 = vpack.c.b16 %v1037, %v1035
        %1070 = vmatpush.bf16.msra.mxu0 %v1052
        %1071 = vmatpush.bf16.msra.mxu0 %v1050
        %1072 = vmatpush.bf16.msra.mxu0 %v1048
        %1073 = vmatpush.bf16.msra.mxu0 %v1046
        %1074 = vmatpush.bf16.msra.mxu0 %v1044
        %1075 = vmatpush.bf16.msra.mxu0 %v1042
        %1076 = vmatpush.bf16.msra.mxu0 %v1040
        %1077 = vmatpush.bf16.msra.mxu0 %v1038
        %1078 = vmatmul.bf16.gmra.mxu0 %v967
        %v1079 = vpop.f32.mrf.mxu0
        %v1080 = vadd.f32 %v986, %v1079
        %v1081 = vpop.f32.mrf.mxu0
        %1082 = vdwg.mxu0
        %1083 = vmatpush.bf16.msra.mxu0 %v1053
        %1084 = vmatpush.bf16.msra.mxu0 %v1051
        %1085 = vmatpush.bf16.msra.mxu0 %v1049
        %1086 = vmatpush.bf16.msra.mxu0 %v1047
        %1087 = vmatpush.bf16.msra.mxu0 %v1045
        %1088 = vmatpush.bf16.msra.mxu0 %v1043
        %1089 = vmatpush.bf16.msra.mxu0 %v1041
        %1090 = vmatpush.bf16.msra.mxu0 %v1039
        %1091 = vmatmul.bf16.gmra.mxu0 %v967
        %v1092 = vpop.f32.mrf.mxu0
        %v1093 = vadd.f32 %v987, %v1092
        %v1094 = vpop.f32.mrf.mxu0
        %1095 = vdwg.mxu0
        %v1096 = vmax.f32 %v1080, 0.0
        %v1097 = vmax.f32 %v1093, 0.0
        %v1098 = vpack.c.bf16 %v1096, %v1096
        %v1099 = vpack.c.bf16 %v1097, %v1097
        %v1100 = vld [vmem:[%s10] sm:$0xf]
        %v1101 = vld [vmem:[%s10 + $0x4] sm:$0xf]
        %v1102 = vld [vmem:[%s10 + $0x8] sm:$0xf]
        %v1103 = vld [vmem:[%s10 + $0xc] sm:$0xf]
        %v1104 = vld [vmem:[%s10 + $0x10] sm:$0xf]
        %v1105 = vld [vmem:[%s10 + $0x14] sm:$0xf]
        %v1106 = vld [vmem:[%s10 + $0x18] sm:$0xf]
        %v1107 = vld [vmem:[%s10 + $0x1c] sm:$0xf]
        %v1108 = vld [vmem:[%s10 + $0x20] sm:$0xf]
        %v1109 = vld [vmem:[%s10 + $0x24] sm:$0xf]
        %v1110 = vld [vmem:[%s10 + $0x28] sm:$0xf]
        %v1111 = vld [vmem:[%s10 + $0x2c] sm:$0xf]
        %v1112 = vld [vmem:[%s10 + $0x30] sm:$0xf]
        %v1113 = vld [vmem:[%s10 + $0x34] sm:$0xf]
        %v1114 = vld [vmem:[%s10 + $0x38] sm:$0xf]
        %v1115 = vld [vmem:[%s10 + $0x3c] sm:$0xf]
        %v1116 = vld [vmem:[%s10 + $0x40] sm:$0xf]
        %v1117 = vld [vmem:[%s10 + $0x44] sm:$0xf]
        %v1118 = vld [vmem:[%s10 + $0x48] sm:$0xf]
        %v1119 = vld [vmem:[%s10 + $0x4c] sm:$0xf]
        %v1120 = vld [vmem:[%s10 + $0x50] sm:$0xf]
        %v1121 = vld [vmem:[%s10 + $0x54] sm:$0xf]
        %v1122 = vld [vmem:[%s10 + $0x58] sm:$0xf]
        %v1123 = vld [vmem:[%s10 + $0x5c] sm:$0xf]
        %v1124 = vld [vmem:[%s10 + $0x60] sm:$0xf]
        %v1125 = vld [vmem:[%s10 + $0x64] sm:$0xf]
        %v1126 = vld [vmem:[%s10 + $0x68] sm:$0xf]
        %v1127 = vld [vmem:[%s10 + $0x6c] sm:$0xf]
        %v1128 = vld [vmem:[%s10 + $0x70] sm:$0xf]
        %v1129 = vld [vmem:[%s10 + $0x74] sm:$0xf]
        %v1130 = vld [vmem:[%s10 + $0x78] sm:$0xf]
        %v1131 = vld [vmem:[%s10 + $0x7c] sm:$0xf]
        %v1164 = vunpack.c.l.b16 %v1100
        %v1165 = vunpack.c.l.b16 %v1101
        %v1166 = vunpack.c.l.b16 %v1102
        %v1167 = vunpack.c.l.b16 %v1103
        %v1168 = vunpack.c.l.b16 %v1104
        %v1169 = vunpack.c.l.b16 %v1105
        %v1170 = vunpack.c.l.b16 %v1106
        %v1171 = vunpack.c.l.b16 %v1107
        %v1172 = vunpack.c.l.b16 %v1108
        %v1173 = vunpack.c.l.b16 %v1109
        %v1174 = vunpack.c.l.b16 %v1110
        %v1175 = vunpack.c.l.b16 %v1111
        %v1176 = vunpack.c.l.b16 %v1112
        %v1177 = vunpack.c.l.b16 %v1113
        %v1178 = vunpack.c.l.b16 %v1114
        %v1179 = vunpack.c.l.b16 %v1115
        %v1180 = vunpack.c.l.b16 %v1116
        %v1181 = vunpack.c.l.b16 %v1117
        %v1182 = vunpack.c.l.b16 %v1118
        %v1183 = vunpack.c.l.b16 %v1119
        %v1184 = vunpack.c.l.b16 %v1120
        %v1185 = vunpack.c.l.b16 %v1121
        %v1186 = vunpack.c.l.b16 %v1122
        %v1187 = vunpack.c.l.b16 %v1123
        %v1188 = vunpack.c.l.b16 %v1124
        %v1189 = vunpack.c.l.b16 %v1125
        %v1190 = vunpack.c.l.b16 %v1126
        %v1191 = vunpack.c.l.b16 %v1127
        %v1192 = vunpack.c.l.b16 %v1128
        %v1193 = vunpack.c.l.b16 %v1129
        %v1194 = vunpack.c.l.b16 %v1130
        %v1195 = vunpack.c.l.b16 %v1131
        %v1196 = vpack.c.b16 %v1165, %v1164
        %v1197 = vpack.c.b16 %v1167, %v1166
        %v1198 = vpack.c.b16 %v1169, %v1168
        %v1199 = vpack.c.b16 %v1171, %v1170
        %v1200 = vpack.c.b16 %v1173, %v1172
        %v1201 = vpack.c.b16 %v1175, %v1174
        %v1202 = vpack.c.b16 %v1177, %v1176
        %v1203 = vpack.c.b16 %v1179, %v1178
        %v1204 = vpack.c.b16 %v1181, %v1180
        %v1205 = vpack.c.b16 %v1183, %v1182
        %v1206 = vpack.c.b16 %v1185, %v1184
        %v1207 = vpack.c.b16 %v1187, %v1186
        %v1208 = vpack.c.b16 %v1189, %v1188
        %v1209 = vpack.c.b16 %v1191, %v1190
        %v1210 = vpack.c.b16 %v1193, %v1192
        %v1211 = vpack.c.b16 %v1195, %v1194
        %1228 = vmatpush.bf16.msra.mxu0 %v1203
        %1229 = vmatpush.bf16.msra.mxu0 %v1202
        %1230 = vmatpush.bf16.msra.mxu0 %v1201
        %1231 = vmatpush.bf16.msra.mxu0 %v1200
        %1232 = vmatpush.bf16.msra.mxu0 %v1199
        %1233 = vmatpush.bf16.msra.mxu0 %v1198
        %1234 = vmatpush.bf16.msra.mxu0 %v1197
        %1235 = vmatpush.bf16.msra.mxu0 %v1196
        %1236 = vmatmul.bf16.gmra.mxu0 %v1098
        %v1237 = vpop.f32.mrf.mxu0
        %v1238 = vadd.f32 0.0, %v1237
        %v1239 = vpop.f32.mrf.mxu0
        %1240 = vdwg.mxu0
        %1241 = vmatpush.bf16.msra.mxu0 %v1211
        %1242 = vmatpush.bf16.msra.mxu0 %v1210
        %1243 = vmatpush.bf16.msra.mxu0 %v1209
        %1244 = vmatpush.bf16.msra.mxu0 %v1208
        %1245 = vmatpush.bf16.msra.mxu0 %v1207
        %1246 = vmatpush.bf16.msra.mxu0 %v1206
        %1247 = vmatpush.bf16.msra.mxu0 %v1205
        %1248 = vmatpush.bf16.msra.mxu0 %v1204
        %1249 = vmatmul.bf16.gmra.mxu0 %v1099
        %v1250 = vpop.f32.mrf.mxu0
        %v1251 = vadd.f32 %v1238, %v1250
        %v1252 = vpop.f32.mrf.mxu0
        %1253 = vdwg.mxu0
        %v1254 = vadd.f32 %v966, %v1251
        %v1255 = vld [vmem:[%s11] sm:$0x1]
        %v1257 = vperm.slane %v1255, 0
        %v1259 = vadd.f32 %v1254, %v1257
        %vm1260 = vcmask 1043456
        %v1261 = vsel %vm1260, %v1259, -inf
        %v1262 = vrot.slane %v1261, 4
        %v1263 = vmax.f32 %v1261, %v1262
        %v1264 = vrot.slane %v1263, 2
        %v1265 = vmax.f32 %v1263, %v1264
        %v1266 = vrot.slane %v1265, 1
        %v1267 = vmax.f32 %v1265, %v1266
        %v1268 = vmax.f32 %v1267, 0.0
        %v1269 = vpack.c.bf16 %v1268, %v1268
        %v1270 = vld [vmem:[%s12] sm:$0xf]
        %v1271 = vld [vmem:[%s12 + $0x4] sm:$0xf]
        %v1272 = vld [vmem:[%s12 + $0x8] sm:$0xf]
        %v1273 = vld [vmem:[%s12 + $0xc] sm:$0xf]
        %v1274 = vld [vmem:[%s12 + $0x10] sm:$0xf]
        %v1275 = vld [vmem:[%s12 + $0x14] sm:$0xf]
        %v1276 = vld [vmem:[%s12 + $0x18] sm:$0xf]
        %v1277 = vld [vmem:[%s12 + $0x1c] sm:$0xf]
        %v1278 = vld [vmem:[%s12 + $0x20] sm:$0xf]
        %v1279 = vld [vmem:[%s12 + $0x24] sm:$0xf]
        %v1280 = vld [vmem:[%s12 + $0x28] sm:$0xf]
        %v1281 = vld [vmem:[%s12 + $0x2c] sm:$0xf]
        %v1282 = vld [vmem:[%s12 + $0x30] sm:$0xf]
        %v1283 = vld [vmem:[%s12 + $0x34] sm:$0xf]
        %v1284 = vld [vmem:[%s12 + $0x38] sm:$0xf]
        %v1285 = vld [vmem:[%s12 + $0x3c] sm:$0xf]
        %v1286 = vld [vmem:[%s13] sm:$0x1]
        %v1303 = vunpack.c.l.b16 %v1270
        %v1304 = vunpack.c.l.b16 %v1271
        %v1305 = vunpack.c.l.b16 %v1272
        %v1306 = vunpack.c.l.b16 %v1273
        %v1307 = vunpack.c.l.b16 %v1274
        %v1308 = vunpack.c.l.b16 %v1275
        %v1309 = vunpack.c.l.b16 %v1276
        %v1310 = vunpack.c.l.b16 %v1277
        %v1311 = vunpack.c.l.b16 %v1278
        %v1312 = vunpack.c.l.b16 %v1279
        %v1313 = vunpack.c.l.b16 %v1280
        %v1314 = vunpack.c.l.b16 %v1281
        %v1315 = vunpack.c.l.b16 %v1282
        %v1316 = vunpack.c.l.b16 %v1283
        %v1317 = vunpack.c.l.b16 %v1284
        %v1318 = vunpack.c.l.b16 %v1285
        %v1319 = vpack.c.b16 %v1304, %v1303
        %v1320 = vpack.c.b16 %v1306, %v1305
        %v1321 = vpack.c.b16 %v1308, %v1307
        %v1322 = vpack.c.b16 %v1310, %v1309
        %v1323 = vpack.c.b16 %v1312, %v1311
        %v1324 = vpack.c.b16 %v1314, %v1313
        %v1325 = vpack.c.b16 %v1316, %v1315
        %v1326 = vpack.c.b16 %v1318, %v1317
        %1335 = vmatpush.bf16.msra.mxu0 %v1326
        %1336 = vmatpush.bf16.msra.mxu0 %v1325
        %1337 = vmatpush.bf16.msra.mxu0 %v1324
        %1338 = vmatpush.bf16.msra.mxu0 %v1323
        %1339 = vmatpush.bf16.msra.mxu0 %v1322
        %1340 = vmatpush.bf16.msra.mxu0 %v1321
        %1341 = vmatpush.bf16.msra.mxu0 %v1320
        %1342 = vmatpush.bf16.msra.mxu0 %v1319
        %1343 = vmatmul.bf16.gmra.mxu0 %v1269
        %v1344 = vpop.f32.mrf.mxu0
        %v1345 = vadd.f32 %v1286, %v1344
        %v1346 = vpop.f32.mrf.mxu0
        %1347 = vdwg.mxu0
        %1348 = vst [vmem:[%s520] sm:$0x1] %v1268
        %vm1349 = vcmask 32768
        %1350 = vst.msk [vmem:[%s514] sm:$0x1] %vm1349, %v1345
        %s1351 = sand.u32 %s350, 1
        %s1352 = scalar_lea.sflag [#allocation3], %s1351
        %s1353 = sand.u32 %s350, 1
        %s1354 = scalar_lea.vmem [#allocation2], %s1353
        %s1355 = sand.u32 %s376, 1
        %s1356 = scalar_lea.sflag [#allocation5], %s1355
        %s1357 = sand.u32 %s376, 1
        %s1358 = scalar_lea.vmem [#allocation4], %s1357
        // Predicated region
        $region77: #{mirai_chile_forward.3} parent=75 // pred_check
          %p1359 = pneg %p360
        $region78: #{mirai_chile_forward.3} parent=75 // pred_check_branch
          %1361 = sbr.rel (%p1359) target = $region80
        $region79: #{mirai_chile_forward.3} parent=75 // pred_region
          %1363 = vsyncadd %s1352, 0
          %s1364 = scalar_lea.hbm %s14, %s33
          %s1366 = sshll.u32 %s1354, 4
          %s1367 = int_to_ptr.vmem [resolvable:$true] %s1366
          %s1368 = sshll.u32 %s1364, 4
          %s1369 = int_to_ptr.hbm [resolvable:$true] %s1368
          %1371 = dma.vmem_to_hbm [thread:$0]  %s1367, 16, %s1369, %s1352
        $region80: #{mirai_chile_forward.3} parent=75 // pred_fallthru
          _
        // Predicated region
        $region81: #{mirai_chile_forward.3} parent=75 // pred_check
          %p1372 = pneg %p386
        $region82: #{mirai_chile_forward.3} parent=75 // pred_check_branch
          %1374 = sbr.rel (%p1372) target = $region84
        $region83: #{mirai_chile_forward.3} parent=75 // pred_region
          %1376 = vsyncadd %s1356, 0
          %s1377 = scalar_lea.hbm %s15, %s33
          %s1379 = sshll.u32 %s1358, 4
          %s1380 = int_to_ptr.vmem [resolvable:$true] %s1379
          %s1381 = sshll.u32 %s1377, 4
          %s1382 = int_to_ptr.hbm [resolvable:$true] %s1381
          %1384 = dma.vmem_to_hbm [thread:$0]  %s1380, 16, %s1382, %s1356
        $region84: #{mirai_chile_forward.3} parent=75 // pred_fallthru
          _
      $region76: #{mirai_chile_forward.3} parent=5 // pred_fallthru
        _
      %p1385 = scmp.le.s32.totalorder 2, %s28
      // Predicated region
      $region85: #{mirai_chile_forward.3} parent=5 // pred_check
        %p1386 = pneg %p1385
      $region86: #{mirai_chile_forward.3} parent=5 // pred_check_branch
        %1388 = sbr.rel (%p1386) target = $region88
      $region87: #{mirai_chile_forward.3} parent=5 // pred_region
        %s1389 = ssub.s32 %s28, 2
        // Predicated region
        $region89: #{mirai_chile_forward.3} parent=87 // pred_check
          %p1390 = pneg %p366
        $region90: #{mirai_chile_forward.3} parent=87 // pred_check_branch
          %1392 = sbr.rel (%p1390) target = $region92
        $region91: #{mirai_chile_forward.3} parent=87 // pred_region
          %s1393 = sand.u32 %s351, 1
          %s1394 = scalar_lea.sflag [#allocation3], %s1393
          %s1395 = sand.u32 %s351, 1
          %s1396 = scalar_lea.vmem [#allocation2], %s1395
          %1398 = dma.done %s1394, 16
        $region92: #{mirai_chile_forward.3} parent=87 // pred_fallthru
          _
        // Predicated region
        $region93: #{mirai_chile_forward.3} parent=87 // pred_check
          %p1399 = pneg %p392
        $region94: #{mirai_chile_forward.3} parent=87 // pred_check_branch
          %1401 = sbr.rel (%p1399) target = $region96
        $region95: #{mirai_chile_forward.3} parent=87 // pred_region
          %s1402 = sand.u32 %s377, 1
          %s1403 = scalar_lea.sflag [#allocation5], %s1402
          %s1404 = sand.u32 %s377, 1
          %s1405 = scalar_lea.vmem [#allocation4], %s1404
          %1407 = dma.done %s1403, 16
        $region96: #{mirai_chile_forward.3} parent=87 // pred_fallthru
          _
      $region88: #{mirai_chile_forward.3} parent=5 // pred_fallthru
        _
    $region6: #{mirai_chile_forward.3} parent=1 // loop_footer
      %s32 = sadd.s32 1, %s28
    $region7: #{mirai_chile_forward.3} parent=1 // loop_footer_branch
      %27 = sbr.rel target = $region3
    $region8: #{mirai_chile_forward.3} parent=1 // loop_exit
      _
    %1408 = vsyncpa [#allocation3], 1
    %s1409 = scalar_lea.sflag [#allocation3], 1
    %1410 = vsyncpa %s1409, 1
    %1411 = vsyncpa [#allocation5], 1
    %s1412 = scalar_lea.sflag [#allocation5], 1
    %1413 = vsyncpa %s1412, 1

</llo_original>
